<compile_context>
chip_gen: v5e
topology: v5e:2x2
jax: 0.10.0
libtpu: 0.0.40
codegen_flags: <defaults>
</compile_context>

<pallas_src>
import functools

import numpy as np
import jax
import jax.numpy as jnp
from jax.experimental import pallas as pl
from jax.experimental.pallas import tpu as pltpu

# ----- module hyper-parameters (defaults of AvgPoolConv2dBNReLU) -----
C_IN, C_OUT = 1, 64
KH = KW = 3
STRIDE = 1
PAD = 1
POOL = 2          # AvgPool2d(kernel_size=2, stride=2)
BN_EPS = 1e-5


# --------------------------------------------------------------------------
# Fused kernel: conv(+bias) -> BN(train stats) -> ReLU -> AvgPool2d(2,2)
#
#   z_ref : (Kz, Mp)        4x4/stride-2 window decomposition of the padded
#                           input; Kz = 16*Cin, Mp = N*Ho*Wo (lane axis).
#   w_ref : (4*Cout, Kz)    conv weights, phase-shifted into the 4x4 canvas,
#                           pool phase q = 2*dh+dw major on rows.
#   b_ref : (4*Cout, 1)     conv bias tiled over the 4 phases.
#   g_ref, bt_ref : (Cout,1) BN gamma / beta.
#   o_ref : (Cout, Mp)      pooled output.
# --------------------------------------------------------------------------
def fused_kernel(z_ref, w_ref, b_ref, g_ref, bt_ref, o_ref, *, cout, m_count, eps):
    # ---- conv for all 4 pool phases in one MXU matmul (the im2col tap
    # gather lives in w_ref's 4x4 canvases; K padding is free — MXU is
    # otherwise idle).
    y = jnp.dot(w_ref[...], z_ref[...],
                preferred_element_type=jnp.float32)        # (4*Cout, Mp) f32
    y = y + b_ref[...]                                     # lane-broadcast bias

    # ---- BatchNorm2d training-mode batch stats, one-pass sum / sum-of-squares
    # (f32 throughout; values are O(1) so E[y^2]-mean^2 cancellation is benign).
    s1 = jnp.sum(y, axis=1, keepdims=True)                 # (4*Cout, 1)
    s2 = jnp.sum(y * y, axis=1, keepdims=True)             # (4*Cout, 1)
    # fold the 4 phase slabs (64-row, sublane-tile-aligned static slices)
    s1 = s1[0:cout] + s1[cout:2 * cout] + s1[2 * cout:3 * cout] + s1[3 * cout:4 * cout]
    s2 = s2[0:cout] + s2[cout:2 * cout] + s2[2 * cout:3 * cout] + s2[3 * cout:4 * cout]
    inv_m = 1.0 / m_count
    mean = s1 * inv_m                                      # (Cout, 1)
    var = s2 * inv_m - mean * mean                         # biased (train mode)
    scale = g_ref[...] * jax.lax.rsqrt(var + eps)          # (Cout, 1)
    shift = bt_ref[...] - mean * scale                     # (Cout, 1)

    # ---- normalize + ReLU fused with the 2x2 avg-pool: one FMA + max per
    # phase slab, accumulated straight into the pool sum (3 full-vreg adds).
    acc = jnp.maximum(y[0:cout] * scale + shift, 0.0)
    for q in range(1, POOL * POOL):
        acc = acc + jnp.maximum(y[q * cout:(q + 1) * cout] * scale + shift, 0.0)
    o_ref[...] = acc * (1.0 / (POOL * POOL))


# --------------------------------------------------------------------------
# Wrapper: NCHW in / NCHW out.  Everything outside the pallas_call is thin
# layout plumbing fused by XLA under this jit:
#   * Zmat: pad + 16 strided (stride-2) slices + stack + reshape.
#   * Wmat / bias tiling: weight-side preprocessing (in a real model this is
#     done once at parameter-load time, not per forward).
# --------------------------------------------------------------------------
@jax.jit
def avgpool_conv2d_bn_relu(x_nchw, w, b, gamma, beta):
    N, Cin, H, W = x_nchw.shape
    Cout = w.shape[0]
    Hc = (H + 2 * PAD - KH) // STRIDE + 1          # conv output spatial size
    Wc = (W + 2 * PAD - KW) // STRIDE + 1
    assert STRIDE == 1, "fused phase-shift formulation assumes stride 1"
    assert Hc % POOL == 0 and Wc % POOL == 0, "pool-even conv output expected"
    Ho, Wo = Hc // POOL, Wc // POOL
    Mp = N * Ho * Wo                               # pooled pixel count (lanes)
    M = N * Hc * Wc                                # BN reduction count
    SU = KH + POOL - 1                             # combined tap+phase offsets = 4
    Kz = SU * SU * Cin                             # contraction dim = 16*Cin

    xf = x_nchw.astype(jnp.float32)
    xp = jnp.pad(xf, ((0, 0), (0, 0), (PAD, PAD), (PAD, PAD)))   # (N,Cin,Hp,Wp)

    # Zmat[(s*SU+u)*Cin+ci, (n,ho,wo)] = xp[n, ci, 2*ho+s, 2*wo+u],  s,u in [0,4)
    slabs = [xp[:, :, s:s + POOL * (Ho - 1) + 1:POOL,
                      u:u + POOL * (Wo - 1) + 1:POOL]
             for s in range(SU) for u in range(SU)]              # (N,Cin,Ho,Wo)
    zst = jnp.stack(slabs, axis=0)                               # (SU*SU,N,Cin,Ho,Wo)
    zmat = jnp.moveaxis(zst, 2, 1).reshape(Kz, Mp)               # (Kz, Mp)

    # Wmat[q*Cout+c, (s*SU+u)*Cin+ci] = w[c,ci, s-dh, u-dw] (0 outside 3x3),
    # with q = 2*dh + dw: the 3x3 kernel embedded at offset (dh,dw) in a 4x4
    # canvas — this is what moves the im2col tap gather onto the MXU.
    wf = w.astype(jnp.float32)
    wrows = []
    for dh in range(POOL):
        for dw in range(POOL):
            wq = jnp.pad(wf, ((0, 0), (0, 0),
                              (dh, SU - KH - dh), (dw, SU - KW - dw)))
            wrows.append(jnp.transpose(wq, (0, 2, 3, 1)).reshape(Cout, Kz))
    wmat = jnp.concatenate(wrows, axis=0)                        # (4*Cout, Kz)

    b_t = jnp.tile(b.astype(jnp.float32), POOL * POOL).reshape(POOL * POOL * Cout, 1)
    g2 = gamma.reshape(Cout, 1).astype(jnp.float32)
    bt2 = beta.reshape(Cout, 1).astype(jnp.float32)

    pooled = pl.pallas_call(
        functools.partial(fused_kernel, cout=Cout, m_count=float(M), eps=BN_EPS),
        out_shape=jax.ShapeDtypeStruct((Cout, Mp), jnp.float32),
        grid=(1,),
        in_specs=[
            pl.BlockSpec((Kz, Mp), lambda i: (0, 0)),
            pl.BlockSpec((POOL * POOL * Cout, Kz), lambda i: (0, 0)),
            pl.BlockSpec((POOL * POOL * Cout, 1), lambda i: (0, 0)),
            pl.BlockSpec((Cout, 1), lambda i: (0, 0)),
            pl.BlockSpec((Cout, 1), lambda i: (0, 0)),
        ],
        out_specs=pl.BlockSpec((Cout, Mp), lambda i: (0, 0)),
        compiler_params=pltpu.CompilerParams(
            dimension_semantics=("arbitrary",)),
    )(zmat, wmat, b_t, g2, bt2)

    # (Cout, N*Ho*Wo) -> NCHW
    out = pooled.reshape(Cout, N, Ho, Wo)
    return jnp.transpose(out, (1, 0, 2, 3))


# --------------------------------------------------------------------------
# Independent numpy reference (PyTorch semantics: conv -> BN train stats ->
# ReLU -> AvgPool2d(2,2)).
# --------------------------------------------------------------------------
def reference_numpy(x, w, b, gamma, beta):
    N, Cin, H, W = x.shape
    Cout = w.shape[0]
    xp = np.pad(x, ((0, 0), (0, 0), (PAD, PAD), (PAD, PAD))).astype(np.float32)
    Hc = (H + 2 * PAD - KH) // STRIDE + 1
    Wc = (W + 2 * PAD - KW) // STRIDE + 1
    out = np.zeros((N, Cout, Hc, Wc), np.float32)
    for kh in range(KH):
        for kw in range(KW):
            win = xp[:, :, kh:kh + STRIDE * (Hc - 1) + 1:STRIDE,
                        kw:kw + STRIDE * (Wc - 1) + 1:STRIDE]   # (N,Cin,Hc,Wc)
            out += np.einsum('nihw,oi->nohw', win, w[:, :, kh, kw])
    out += b[None, :, None, None]
    mean = out.mean(axis=(0, 2, 3), keepdims=True)
    var = out.var(axis=(0, 2, 3), keepdims=True)     # biased, BN train mode
    y = (out - mean) / np.sqrt(var + BN_EPS)
    y = y * gamma[None, :, None, None] + beta[None, :, None, None]
    y = np.maximum(y, 0.0)
    Ho, Wo = Hc // POOL, Wc // POOL
    y = y[:, :, :POOL * Ho, :POOL * Wo].reshape(N, Cout, Ho, POOL, Wo, POOL)
    return y.mean(axis=(3, 5))


if __name__ == "__main__":
    key = jax.random.PRNGKey(0)
    k1, k2, k3, k4, k5 = jax.random.split(key, 5)

    N, H, W = 2, 16, 16
    x = jax.random.normal(k1, (N, C_IN, H, W), jnp.float32)
    w = 0.1 * jax.random.normal(k2, (C_OUT, C_IN, KH, KW), jnp.float32)
    b = 0.1 * jax.random.normal(k3, (C_OUT,), jnp.float32)
    gamma = 1.0 + 0.1 * jax.random.normal(k4, (C_OUT,), jnp.float32)
    beta = 0.1 * jax.random.normal(k5, (C_OUT,), jnp.float32)

    out = jax.block_until_ready(avgpool_conv2d_bn_relu(x, w, b, gamma, beta))

    ref = reference_numpy(np.asarray(x), np.asarray(w), np.asarray(b),
                          np.asarray(gamma), np.asarray(beta))
    np.testing.assert_allclose(np.asarray(out), ref, rtol=1e-4, atol=1e-4)
    print("KERNEL_OK")
</pallas_src>

<mosaic_0001>
module attributes {stable_mosaic.version = 11 : i64} {
  func.func @fused_kernel(%arg0: i32, %arg1: memref<16x128xf32, #tpu.memory_space<vmem>>, %arg2: memref<256x16xf32, #tpu.memory_space<vmem>>, %arg3: memref<256x1xf32, #tpu.memory_space<vmem>>, %arg4: memref<64x1xf32, #tpu.memory_space<vmem>>, %arg5: memref<64x1xf32, #tpu.memory_space<vmem>>, %arg6: memref<64x128xf32, #tpu.memory_space<vmem>>) attributes {dimension_semantics = [#tpu.dimension_semantics<arbitrary>], iteration_bounds = array<i64: 1>, scalar_prefetch = 0 : i64, scratch_operands = 0 : i64, tpu.core_type = #tpu.core_type<tc>, window_params = [{pipeline_mode = #tpu.pipeline_mode<synchronous>, transform_indices = @transform_0, window_bounds = array<i64: 16, 128>}, {pipeline_mode = #tpu.pipeline_mode<synchronous>, transform_indices = @transform_1, window_bounds = array<i64: 256, 16>}, {pipeline_mode = #tpu.pipeline_mode<synchronous>, transform_indices = @transform_2, window_bounds = array<i64: 256, 1>}, {pipeline_mode = #tpu.pipeline_mode<synchronous>, transform_indices = @transform_3, window_bounds = array<i64: 64, 1>}, {pipeline_mode = #tpu.pipeline_mode<synchronous>, transform_indices = @transform_4, window_bounds = array<i64: 64, 1>}, {pipeline_mode = #tpu.pipeline_mode<synchronous>, transform_indices = @transform_5, window_bounds = array<i64: 64, 128>}]} {
    %c0 = arith.constant 0 : index
    %c0_0 = arith.constant 0 : index
    %0 = vector.load %arg2[%c0, %c0_0] : memref<256x16xf32, #tpu.memory_space<vmem>>, vector<256x16xf32>
    %c0_1 = arith.constant 0 : index
    %c0_2 = arith.constant 0 : index
    %1 = vector.load %arg1[%c0_1, %c0_2] : memref<16x128xf32, #tpu.memory_space<vmem>>, vector<16x128xf32>
    %cst = arith.constant dense<0.000000e+00> : vector<256x128xf32>
    %2 = tpu.matmul %0, %1, %cst {dimension_numbers = #tpu.dot_dimension_numbers<[1], [0], [0], [1], [0, 0, 1, 1], [], []>} : vector<256x16xf32>, vector<16x128xf32>, vector<256x128xf32> -> vector<256x128xf32>
    %c0_3 = arith.constant 0 : index
    %c0_4 = arith.constant 0 : index
    %3 = vector.load %arg3[%c0_3, %c0_4] : memref<256x1xf32, #tpu.memory_space<vmem>>, vector<256x1xf32>
    %4 = vector.broadcast %3 : vector<256x1xf32> to vector<256x128xf32>
    %5 = arith.addf %2, %4 : vector<256x128xf32>
    %cst_5 = arith.constant dense<0.000000e+00> : vector<256xf32>
    %6 = vector.multi_reduction <add>, %5, %cst_5 [1] : vector<256x128xf32> to vector<256xf32>
    %7 = vector.shape_cast %6 : vector<256xf32> to vector<256x1xf32>
    %8 = arith.mulf %5, %5 : vector<256x128xf32>
    %cst_6 = arith.constant dense<0.000000e+00> : vector<256xf32>
    %9 = vector.multi_reduction <add>, %8, %cst_6 [1] : vector<256x128xf32> to vector<256xf32>
    %10 = vector.shape_cast %9 : vector<256xf32> to vector<256x1xf32>
    %11 = vector.extract_strided_slice %7 {offsets = [0, 0], sizes = [64, 1], strides = [1, 1]} : vector<256x1xf32> to vector<64x1xf32>
    %12 = vector.extract_strided_slice %7 {offsets = [64, 0], sizes = [64, 1], strides = [1, 1]} : vector<256x1xf32> to vector<64x1xf32>
    %13 = arith.addf %11, %12 : vector<64x1xf32>
    %14 = vector.extract_strided_slice %7 {offsets = [128, 0], sizes = [64, 1], strides = [1, 1]} : vector<256x1xf32> to vector<64x1xf32>
    %15 = arith.addf %13, %14 : vector<64x1xf32>
    %16 = vector.extract_strided_slice %7 {offsets = [192, 0], sizes = [64, 1], strides = [1, 1]} : vector<256x1xf32> to vector<64x1xf32>
    %17 = arith.addf %15, %16 : vector<64x1xf32>
    %18 = vector.extract_strided_slice %10 {offsets = [0, 0], sizes = [64, 1], strides = [1, 1]} : vector<256x1xf32> to vector<64x1xf32>
    %19 = vector.extract_strided_slice %10 {offsets = [64, 0], sizes = [64, 1], strides = [1, 1]} : vector<256x1xf32> to vector<64x1xf32>
    %20 = arith.addf %18, %19 : vector<64x1xf32>
    %21 = vector.extract_strided_slice %10 {offsets = [128, 0], sizes = [64, 1], strides = [1, 1]} : vector<256x1xf32> to vector<64x1xf32>
    %22 = arith.addf %20, %21 : vector<64x1xf32>
    %23 = vector.extract_strided_slice %10 {offsets = [192, 0], sizes = [64, 1], strides = [1, 1]} : vector<256x1xf32> to vector<64x1xf32>
    %24 = arith.addf %22, %23 : vector<64x1xf32>
    %cst_7 = arith.constant 0.001953125 : f32
    %25 = vector.broadcast %cst_7 : f32 to vector<64x1xf32>
    %26 = arith.mulf %17, %25 : vector<64x1xf32>
    %cst_8 = arith.constant 0.001953125 : f32
    %27 = vector.broadcast %cst_8 : f32 to vector<64x1xf32>
    %28 = arith.mulf %24, %27 : vector<64x1xf32>
    %29 = arith.mulf %26, %26 : vector<64x1xf32>
    %30 = arith.subf %28, %29 : vector<64x1xf32>
    %c0_9 = arith.constant 0 : index
    %c0_10 = arith.constant 0 : index
    %31 = vector.load %arg4[%c0_9, %c0_10] : memref<64x1xf32, #tpu.memory_space<vmem>>, vector<64x1xf32>
    %cst_11 = arith.constant 9.99999974E-6 : f32
    %32 = vector.broadcast %cst_11 : f32 to vector<64x1xf32>
    %33 = arith.addf %30, %32 : vector<64x1xf32>
    %34 = math.rsqrt %33 : vector<64x1xf32>
    %35 = arith.mulf %31, %34 : vector<64x1xf32>
    %c0_12 = arith.constant 0 : index
    %c0_13 = arith.constant 0 : index
    %36 = vector.load %arg5[%c0_12, %c0_13] : memref<64x1xf32, #tpu.memory_space<vmem>>, vector<64x1xf32>
    %37 = arith.mulf %26, %35 : vector<64x1xf32>
    %38 = arith.subf %36, %37 : vector<64x1xf32>
    %39 = vector.extract_strided_slice %5 {offsets = [0, 0], sizes = [64, 128], strides = [1, 1]} : vector<256x128xf32> to vector<64x128xf32>
    %40 = vector.broadcast %35 : vector<64x1xf32> to vector<64x128xf32>
    %41 = arith.mulf %39, %40 : vector<64x128xf32>
    %42 = vector.broadcast %38 : vector<64x1xf32> to vector<64x128xf32>
    %43 = arith.addf %41, %42 : vector<64x128xf32>
    %cst_14 = arith.constant 0.000000e+00 : f32
    %44 = vector.broadcast %cst_14 : f32 to vector<64x128xf32>
    %45 = arith.maximumf %43, %44 : vector<64x128xf32>
    %46 = vector.extract_strided_slice %5 {offsets = [64, 0], sizes = [64, 128], strides = [1, 1]} : vector<256x128xf32> to vector<64x128xf32>
    %47 = vector.broadcast %35 : vector<64x1xf32> to vector<64x128xf32>
    %48 = arith.mulf %46, %47 : vector<64x128xf32>
    %49 = vector.broadcast %38 : vector<64x1xf32> to vector<64x128xf32>
    %50 = arith.addf %48, %49 : vector<64x128xf32>
    %cst_15 = arith.constant 0.000000e+00 : f32
    %51 = vector.broadcast %cst_15 : f32 to vector<64x128xf32>
    %52 = arith.maximumf %50, %51 : vector<64x128xf32>
    %53 = arith.addf %45, %52 : vector<64x128xf32>
    %54 = vector.extract_strided_slice %5 {offsets = [128, 0], sizes = [64, 128], strides = [1, 1]} : vector<256x128xf32> to vector<64x128xf32>
    %55 = vector.broadcast %35 : vector<64x1xf32> to vector<64x128xf32>
    %56 = arith.mulf %54, %55 : vector<64x128xf32>
    %57 = vector.broadcast %38 : vector<64x1xf32> to vector<64x128xf32>
    %58 = arith.addf %56, %57 : vector<64x128xf32>
    %cst_16 = arith.constant 0.000000e+00 : f32
    %59 = vector.broadcast %cst_16 : f32 to vector<64x128xf32>
    %60 = arith.maximumf %58, %59 : vector<64x128xf32>
    %61 = arith.addf %53, %60 : vector<64x128xf32>
    %62 = vector.extract_strided_slice %5 {offsets = [192, 0], sizes = [64, 128], strides = [1, 1]} : vector<256x128xf32> to vector<64x128xf32>
    %63 = vector.broadcast %35 : vector<64x1xf32> to vector<64x128xf32>
    %64 = arith.mulf %62, %63 : vector<64x128xf32>
    %65 = vector.broadcast %38 : vector<64x1xf32> to vector<64x128xf32>
    %66 = arith.addf %64, %65 : vector<64x128xf32>
    %cst_17 = arith.constant 0.000000e+00 : f32
    %67 = vector.broadcast %cst_17 : f32 to vector<64x128xf32>
    %68 = arith.maximumf %66, %67 : vector<64x128xf32>
    %69 = arith.addf %61, %68 : vector<64x128xf32>
    %cst_18 = arith.constant 2.500000e-01 : f32
    %70 = vector.broadcast %cst_18 : f32 to vector<64x128xf32>
    %71 = arith.mulf %69, %70 : vector<64x128xf32>
    %c0_19 = arith.constant 0 : index
    %c0_20 = arith.constant 0 : index
    %72 = vector.load %arg6[%c0_19, %c0_20] : memref<64x128xf32, #tpu.memory_space<vmem>>, vector<64x128xf32>
    tpu.vector_store %arg6[%c0_19, %c0_20], %71 {strides = array<i32>} : memref<64x128xf32, #tpu.memory_space<vmem>>, vector<64x128xf32>,
    return
  }
  func.func @transform_0(%arg0: i32) -> (i32, i32) {
    %c0_i32 = arith.constant 0 : i32
    %c0_i32_0 = arith.constant 0 : i32
    %c0_i32_1 = arith.constant 0 : i32
    return %c0_i32, %c0_i32_0 : i32, i32
  }
  func.func @transform_1(%arg0: i32) -> (i32, i32) {
    %c0_i32 = arith.constant 0 : i32
    %c0_i32_0 = arith.constant 0 : i32
    %c0_i32_1 = arith.constant 0 : i32
    return %c0_i32, %c0_i32_0 : i32, i32
  }
  func.func @transform_2(%arg0: i32) -> (i32, i32) {
    %c0_i32 = arith.constant 0 : i32
    %c0_i32_0 = arith.constant 0 : i32
    %c0_i32_1 = arith.constant 0 : i32
    return %c0_i32, %c0_i32_0 : i32, i32
  }
  func.func @transform_3(%arg0: i32) -> (i32, i32) {
    %c0_i32 = arith.constant 0 : i32
    %c0_i32_0 = arith.constant 0 : i32
    %c0_i32_1 = arith.constant 0 : i32
    return %c0_i32, %c0_i32_0 : i32, i32
  }
  func.func @transform_4(%arg0: i32) -> (i32, i32) {
    %c0_i32 = arith.constant 0 : i32
    %c0_i32_0 = arith.constant 0 : i32
    %c0_i32_1 = arith.constant 0 : i32
    return %c0_i32, %c0_i32_0 : i32, i32
  }
  func.func @transform_5(%arg0: i32) -> (i32, i32) {
    %c0_i32 = arith.constant 0 : i32
    %c0_i32_0 = arith.constant 0 : i32
    %c0_i32_1 = arith.constant 0 : i32
    return %c0_i32, %c0_i32_0 : i32, i32
  }
}

</mosaic_0001>

<llo_original>
// kernel: tile.8
$region0: #{tile.8}
  #allocation0 [shape = 's32[1]{0}', space=sflag, size = 0x4, scoped, tag = 'scoped memory for tile.8']
  %s0 = inlined_call_operand.vmem [shape: f32[64], index: 0, kind: input, shape index: {}]
  %s1 = inlined_call_operand.vmem [shape: f32[4,64], index: 1, kind: output, shape index: {}]
  // Predicated region
  $region2: #{tile.8} parent=0 // pred_check
    _
  $region3: #{tile.8} parent=0 // pred_check_branch
    %3 = sbr.rel (0) target = $region5
  $region4: #{tile.8} parent=0 // pred_region
    _
  $region5: #{tile.8} parent=0 // pred_fallthru
    _
  %v4 = vld [vmem:[%s0] ss:$0 sm:$0xff]
  %5 = vst [vmem:[%s1] sm:$0xf] %v4

// kernel: tile.0
$region0: #{tile.0}
  %s0 = inlined_call_operand.vmem [shape: f32[4,64], index: 0, kind: input, shape index: {}]
  %s1 = inlined_call_operand.vmem [shape: f32[256,1], index: 1, kind: output, shape index: {}]
  $region1: #{tile.0} parent=0
    #allocation0 [shape = 'u8[4096]{0}', space=vmem, size = 0x1000, scoped, tag = 'scoped mem for input reshape']
    %s3 = ssub.s32 16, 1
    %v4 = vld [vmem:[%s0] sm:%s3]
    %5 = vst [vmem:[#allocation0] sm:%s3] %v4
    %v6 = vld [vmem:[#allocation0] sm:$0xf]
    %vm7 = vcmask 7168
    %8 = vst.msk [vmem:[%s1] sm:$0x1] %vm7, %v6
    %s9 = scalar_lea.vmem %s1, 63
    %10 = vst.msk [vmem:[%s9] sm:$0x2] %vm7, %v6
    %s11 = scalar_lea.vmem %s1, 126
    %12 = vst.msk [vmem:[%s11] sm:$0x4] %vm7, %v6
    %s13 = scalar_lea.vmem %s1, 189
    %14 = vst.msk [vmem:[%s13] sm:$0x8] %vm7, %v6
    %v15 = vld [vmem:[#allocation0] sm:$0xf]
    %16 = vrot.lane.b32.xlu0 %v15, 127
    %v17 = vpop.permute.xlu0 %16
    %vm18 = vcmask 7168
    %s19 = scalar_lea.vmem %s1, 1
    %20 = vst.msk [vmem:[%s19] sm:$0x1] %vm18, %v17
    %s21 = scalar_lea.vmem %s1, 64
    %22 = vst.msk [vmem:[%s21] sm:$0x2] %vm18, %v17
    %s23 = scalar_lea.vmem %s1, 127
    %24 = vst.msk [vmem:[%s23] sm:$0x4] %vm18, %v17
    %s25 = scalar_lea.vmem %s1, 190
    %26 = vst.msk [vmem:[%s25] sm:$0x8] %vm18, %v17
    %v27 = vld [vmem:[#allocation0] sm:$0xf]
    %28 = vrot.lane.b32.xlu0 %v27, 126
    %v29 = vpop.permute.xlu0 %28
    %vm30 = vcmask 7168
    %s31 = scalar_lea.vmem %s1, 2
    %32 = vst.msk [vmem:[%s31] sm:$0x1] %vm30, %v29
    %s33 = scalar_lea.vmem %s1, 65
    %34 = vst.msk [vmem:[%s33] sm:$0x2] %vm30, %v29
    %s35 = scalar_lea.vmem %s1, 128
    %36 = vst.msk [vmem:[%s35] sm:$0x4] %vm30, %v29
    %s37 = scalar_lea.vmem %s1, 191
    %38 = vst.msk [vmem:[%s37] sm:$0x8] %vm30, %v29
    %v39 = vld [vmem:[#allocation0] sm:$0xf]
    %40 = vrot.lane.b32.xlu0 %v39, 125
    %v41 = vpop.permute.xlu0 %40
    %vm42 = vcmask 7168
    %s43 = scalar_lea.vmem %s1, 3
    %44 = vst.msk [vmem:[%s43] sm:$0x1] %vm42, %v41
    %s45 = scalar_lea.vmem %s1, 66
    %46 = vst.msk [vmem:[%s45] sm:$0x2] %vm42, %v41
    %s47 = scalar_lea.vmem %s1, 129
    %48 = vst.msk [vmem:[%s47] sm:$0x4] %vm42, %v41
    %s49 = scalar_lea.vmem %s1, 192
    %50 = vst.msk [vmem:[%s49] sm:$0x8] %vm42, %v41
    %v51 = vld [vmem:[#allocation0] sm:$0xf]
    %52 = vrot.lane.b32.xlu0 %v51, 124
    %v53 = vpop.permute.xlu0 %52
    %vm54 = vcmask 7168
    %s55 = scalar_lea.vmem %s1, 4
    %56 = vst.msk [vmem:[%s55] sm:$0x1] %vm54, %v53
    %s57 = scalar_lea.vmem %s1, 67
    %58 = vst.msk [vmem:[%s57] sm:$0x2] %vm54, %v53
    %s59 = scalar_lea.vmem %s1, 130
    %60 = vst.msk [vmem:[%s59] sm:$0x4] %vm54, %v53
    %s61 = scalar_lea.vmem %s1, 193
    %62 = vst.msk [vmem:[%s61] sm:$0x8] %vm54, %v53
    %v63 = vld [vmem:[#allocation0] sm:$0xf]
    %64 = vrot.lane.b32.xlu0 %v63, 123
    %v65 = vpop.permute.xlu0 %64
    %vm66 = vcmask 7168
    %s67 = scalar_lea.vmem %s1, 5
    %68 = vst.msk [vmem:[%s67] sm:$0x1] %vm66, %v65
    %s69 = scalar_lea.vmem %s1, 68
    %70 = vst.msk [vmem:[%s69] sm:$0x2] %vm66, %v65
    %s71 = scalar_lea.vmem %s1, 131
    %72 = vst.msk [vmem:[%s71] sm:$0x4] %vm66, %v65
    %s73 = scalar_lea.vmem %s1, 194
    %74 = vst.msk [vmem:[%s73] sm:$0x8] %vm66, %v65
    %v75 = vld [vmem:[#allocation0] sm:$0xf]
    %76 = vrot.lane.b32.xlu0 %v75, 122
    %v77 = vpop.permute.xlu0 %76
    %vm78 = vcmask 7168
    %s79 = scalar_lea.vmem %s1, 6
    %80 = vst.msk [vmem:[%s79] sm:$0x1] %vm78, %v77
    %s81 = scalar_lea.vmem %s1, 69
    %82 = vst.msk [vmem:[%s81] sm:$0x2] %vm78, %v77
    %s83 = scalar_lea.vmem %s1, 132
    %84 = vst.msk [vmem:[%s83] sm:$0x4] %vm78, %v77
    %s85 = scalar_lea.vmem %s1, 195
    %86 = vst.msk [vmem:[%s85] sm:$0x8] %vm78, %v77
    %v87 = vld [vmem:[#allocation0] sm:$0xf]
    %88 = vrot.lane.b32.xlu0 %v87, 121
    %v89 = vpop.permute.xlu0 %88
    %vm90 = vcmask 7168
    %s91 = scalar_lea.vmem %s1, 7
    %92 = vst.msk [vmem:[%s91] sm:$0x1] %vm90, %v89
    %s93 = scalar_lea.vmem %s1, 70
    %94 = vst.msk [vmem:[%s93] sm:$0x2] %vm90, %v89
    %s95 = scalar_lea.vmem %s1, 133
    %96 = vst.msk [vmem:[%s95] sm:$0x4] %vm90, %v89
    %s97 = scalar_lea.vmem %s1, 196
    %98 = vst.msk [vmem:[%s97] sm:$0x8] %vm90, %v89
    %v99 = vld [vmem:[#allocation0] sm:$0xf]
    %100 = vrot.lane.b32.xlu0 %v99, 120
    %v101 = vpop.permute.xlu0 %100
    %vm102 = vcmask 7168
    %s103 = scalar_lea.vmem %s1, 8
    %104 = vst.msk [vmem:[%s103] sm:$0x1] %vm102, %v101
    %s105 = scalar_lea.vmem %s1, 71
    %106 = vst.msk [vmem:[%s105] sm:$0x2] %vm102, %v101
    %s107 = scalar_lea.vmem %s1, 134
    %108 = vst.msk [vmem:[%s107] sm:$0x4] %vm102, %v101
    %s109 = scalar_lea.vmem %s1, 197
    %110 = vst.msk [vmem:[%s109] sm:$0x8] %vm102, %v101
    %v111 = vld [vmem:[#allocation0] sm:$0xf]
    %112 = vrot.lane.b32.xlu0 %v111, 119
    %v113 = vpop.permute.xlu0 %112
    %vm114 = vcmask 7168
    %s115 = scalar_lea.vmem %s1, 9
    %116 = vst.msk [vmem:[%s115] sm:$0x1] %vm114, %v113
    %s117 = scalar_lea.vmem %s1, 72
    %118 = vst.msk [vmem:[%s117] sm:$0x2] %vm114, %v113
    %s119 = scalar_lea.vmem %s1, 135
    %120 = vst.msk [vmem:[%s119] sm:$0x4] %vm114, %v113
    %s121 = scalar_lea.vmem %s1, 198
    %122 = vst.msk [vmem:[%s121] sm:$0x8] %vm114, %v113
    %v123 = vld [vmem:[#allocation0] sm:$0xf]
    %124 = vrot.lane.b32.xlu0 %v123, 118
    %v125 = vpop.permute.xlu0 %124
    %vm126 = vcmask 7168
    %s127 = scalar_lea.vmem %s1, 10
    %128 = vst.msk [vmem:[%s127] sm:$0x1] %vm126, %v125
    %s129 = scalar_lea.vmem %s1, 73
    %130 = vst.msk [vmem:[%s129] sm:$0x2] %vm126, %v125
    %s131 = scalar_lea.vmem %s1, 136
    %132 = vst.msk [vmem:[%s131] sm:$0x4] %vm126, %v125
    %s133 = scalar_lea.vmem %s1, 199
    %134 = vst.msk [vmem:[%s133] sm:$0x8] %vm126, %v125
    %v135 = vld [vmem:[#allocation0] sm:$0xf]
    %136 = vrot.lane.b32.xlu0 %v135, 117
    %v137 = vpop.permute.xlu0 %136
    %vm138 = vcmask 7168
    %s139 = scalar_lea.vmem %s1, 11
    %140 = vst.msk [vmem:[%s139] sm:$0x1] %vm138, %v137
    %s141 = scalar_lea.vmem %s1, 74
    %142 = vst.msk [vmem:[%s141] sm:$0x2] %vm138, %v137
    %s143 = scalar_lea.vmem %s1, 137
    %144 = vst.msk [vmem:[%s143] sm:$0x4] %vm138, %v137
    %s145 = scalar_lea.vmem %s1, 200
    %146 = vst.msk [vmem:[%s145] sm:$0x8] %vm138, %v137
    %v147 = vld [vmem:[#allocation0] sm:$0xf]
    %148 = vrot.lane.b32.xlu0 %v147, 116
    %v149 = vpop.permute.xlu0 %148
    %vm150 = vcmask 7168
    %s151 = scalar_lea.vmem %s1, 12
    %152 = vst.msk [vmem:[%s151] sm:$0x1] %vm150, %v149
    %s153 = scalar_lea.vmem %s1, 75
    %154 = vst.msk [vmem:[%s153] sm:$0x2] %vm150, %v149
    %s155 = scalar_lea.vmem %s1, 138
    %156 = vst.msk [vmem:[%s155] sm:$0x4] %vm150, %v149
    %s157 = scalar_lea.vmem %s1, 201
    %158 = vst.msk [vmem:[%s157] sm:$0x8] %vm150, %v149
    %v159 = vld [vmem:[#allocation0] sm:$0xf]
    %160 = vrot.lane.b32.xlu0 %v159, 115
    %v161 = vpop.permute.xlu0 %160
    %vm162 = vcmask 7168
    %s163 = scalar_lea.vmem %s1, 13
    %164 = vst.msk [vmem:[%s163] sm:$0x1] %vm162, %v161
    %s165 = scalar_lea.vmem %s1, 76
    %166 = vst.msk [vmem:[%s165] sm:$0x2] %vm162, %v161
    %s167 = scalar_lea.vmem %s1, 139
    %168 = vst.msk [vmem:[%s167] sm:$0x4] %vm162, %v161
    %s169 = scalar_lea.vmem %s1, 202
    %170 = vst.msk [vmem:[%s169] sm:$0x8] %vm162, %v161
    %v171 = vld [vmem:[#allocation0] sm:$0xf]
    %172 = vrot.lane.b32.xlu0 %v171, 114
    %v173 = vpop.permute.xlu0 %172
    %vm174 = vcmask 7168
    %s175 = scalar_lea.vmem %s1, 14
    %176 = vst.msk [vmem:[%s175] sm:$0x1] %vm174, %v173
    %s177 = scalar_lea.vmem %s1, 77
    %178 = vst.msk [vmem:[%s177] sm:$0x2] %vm174, %v173
    %s179 = scalar_lea.vmem %s1, 140
    %180 = vst.msk [vmem:[%s179] sm:$0x4] %vm174, %v173
    %s181 = scalar_lea.vmem %s1, 203
    %182 = vst.msk [vmem:[%s181] sm:$0x8] %vm174, %v173
    %v183 = vld [vmem:[#allocation0] sm:$0xf]
    %184 = vrot.lane.b32.xlu0 %v183, 113
    %v185 = vpop.permute.xlu0 %184
    %vm186 = vcmask 7168
    %s187 = scalar_lea.vmem %s1, 15
    %188 = vst.msk [vmem:[%s187] sm:$0x1] %vm186, %v185
    %s189 = scalar_lea.vmem %s1, 78
    %190 = vst.msk [vmem:[%s189] sm:$0x2] %vm186, %v185
    %s191 = scalar_lea.vmem %s1, 141
    %192 = vst.msk [vmem:[%s191] sm:$0x4] %vm186, %v185
    %s193 = scalar_lea.vmem %s1, 204
    %194 = vst.msk [vmem:[%s193] sm:$0x8] %vm186, %v185
    %v195 = vld [vmem:[#allocation0] sm:$0xf]
    %196 = vrot.lane.b32.xlu0 %v195, 112
    %v197 = vpop.permute.xlu0 %196
    %vm198 = vcmask 7168
    %s199 = scalar_lea.vmem %s1, 16
    %200 = vst.msk [vmem:[%s199] sm:$0x1] %vm198, %v197
    %s201 = scalar_lea.vmem %s1, 79
    %202 = vst.msk [vmem:[%s201] sm:$0x2] %vm198, %v197
    %s203 = scalar_lea.vmem %s1, 142
    %204 = vst.msk [vmem:[%s203] sm:$0x4] %vm198, %v197
    %s205 = scalar_lea.vmem %s1, 205
    %206 = vst.msk [vmem:[%s205] sm:$0x8] %vm198, %v197
    %v207 = vld [vmem:[#allocation0] sm:$0xf]
    %208 = vrot.lane.b32.xlu0 %v207, 111
    %v209 = vpop.permute.xlu0 %208
    %vm210 = vcmask 7168
    %s211 = scalar_lea.vmem %s1, 17
    %212 = vst.msk [vmem:[%s211] sm:$0x1] %vm210, %v209
    %s213 = scalar_lea.vmem %s1, 80
    %214 = vst.msk [vmem:[%s213] sm:$0x2] %vm210, %v209
    %s215 = scalar_lea.vmem %s1, 143
    %216 = vst.msk [vmem:[%s215] sm:$0x4] %vm210, %v209
    %s217 = scalar_lea.vmem %s1, 206
    %218 = vst.msk [vmem:[%s217] sm:$0x8] %vm210, %v209
    %v219 = vld [vmem:[#allocation0] sm:$0xf]
    %220 = vrot.lane.b32.xlu0 %v219, 110
    %v221 = vpop.permute.xlu0 %220
    %vm222 = vcmask 7168
    %s223 = scalar_lea.vmem %s1, 18
    %224 = vst.msk [vmem:[%s223] sm:$0x1] %vm222, %v221
    %s225 = scalar_lea.vmem %s1, 81
    %226 = vst.msk [vmem:[%s225] sm:$0x2] %vm222, %v221
    %s227 = scalar_lea.vmem %s1, 144
    %228 = vst.msk [vmem:[%s227] sm:$0x4] %vm222, %v221
    %s229 = scalar_lea.vmem %s1, 207
    %230 = vst.msk [vmem:[%s229] sm:$0x8] %vm222, %v221
    %v231 = vld [vmem:[#allocation0] sm:$0xf]
    %232 = vrot.lane.b32.xlu0 %v231, 109
    %v233 = vpop.permute.xlu0 %232
    %vm234 = vcmask 7168
    %s235 = scalar_lea.vmem %s1, 19
    %236 = vst.msk [vmem:[%s235] sm:$0x1] %vm234, %v233
    %s237 = scalar_lea.vmem %s1, 82
    %238 = vst.msk [vmem:[%s237] sm:$0x2] %vm234, %v233
    %s239 = scalar_lea.vmem %s1, 145
    %240 = vst.msk [vmem:[%s239] sm:$0x4] %vm234, %v233
    %s241 = scalar_lea.vmem %s1, 208
    %242 = vst.msk [vmem:[%s241] sm:$0x8] %vm234, %v233
    %v243 = vld [vmem:[#allocation0] sm:$0xf]
    %244 = vrot.lane.b32.xlu0 %v243, 108
    %v245 = vpop.permute.xlu0 %244
    %vm246 = vcmask 7168
    %s247 = scalar_lea.vmem %s1, 20
    %248 = vst.msk [vmem:[%s247] sm:$0x1] %vm246, %v245
    %s249 = scalar_lea.vmem %s1, 83
    %250 = vst.msk [vmem:[%s249] sm:$0x2] %vm246, %v245
    %s251 = scalar_lea.vmem %s1, 146
    %252 = vst.msk [vmem:[%s251] sm:$0x4] %vm246, %v245
    %s253 = scalar_lea.vmem %s1, 209
    %254 = vst.msk [vmem:[%s253] sm:$0x8] %vm246, %v245
    %v255 = vld [vmem:[#allocation0] sm:$0xf]
    %256 = vrot.lane.b32.xlu0 %v255, 107
    %v257 = vpop.permute.xlu0 %256
    %vm258 = vcmask 7168
    %s259 = scalar_lea.vmem %s1, 21
    %260 = vst.msk [vmem:[%s259] sm:$0x1] %vm258, %v257
    %s261 = scalar_lea.vmem %s1, 84
    %262 = vst.msk [vmem:[%s261] sm:$0x2] %vm258, %v257
    %s263 = scalar_lea.vmem %s1, 147
    %264 = vst.msk [vmem:[%s263] sm:$0x4] %vm258, %v257
    %s265 = scalar_lea.vmem %s1, 210
    %266 = vst.msk [vmem:[%s265] sm:$0x8] %vm258, %v257
    %v267 = vld [vmem:[#allocation0] sm:$0xf]
    %268 = vrot.lane.b32.xlu0 %v267, 106
    %v269 = vpop.permute.xlu0 %268
    %vm270 = vcmask 7168
    %s271 = scalar_lea.vmem %s1, 22
    %272 = vst.msk [vmem:[%s271] sm:$0x1] %vm270, %v269
    %s273 = scalar_lea.vmem %s1, 85
    %274 = vst.msk [vmem:[%s273] sm:$0x2] %vm270, %v269
    %s275 = scalar_lea.vmem %s1, 148
    %276 = vst.msk [vmem:[%s275] sm:$0x4] %vm270, %v269
    %s277 = scalar_lea.vmem %s1, 211
    %278 = vst.msk [vmem:[%s277] sm:$0x8] %vm270, %v269
    %v279 = vld [vmem:[#allocation0] sm:$0xf]
    %280 = vrot.lane.b32.xlu0 %v279, 105
    %v281 = vpop.permute.xlu0 %280
    %vm282 = vcmask 7168
    %s283 = scalar_lea.vmem %s1, 23
    %284 = vst.msk [vmem:[%s283] sm:$0x1] %vm282, %v281
    %s285 = scalar_lea.vmem %s1, 86
    %286 = vst.msk [vmem:[%s285] sm:$0x2] %vm282, %v281
    %s287 = scalar_lea.vmem %s1, 149
    %288 = vst.msk [vmem:[%s287] sm:$0x4] %vm282, %v281
    %s289 = scalar_lea.vmem %s1, 212
    %290 = vst.msk [vmem:[%s289] sm:$0x8] %vm282, %v281
    %v291 = vld [vmem:[#allocation0] sm:$0xf]
    %292 = vrot.lane.b32.xlu0 %v291, 104
    %v293 = vpop.permute.xlu0 %292
    %vm294 = vcmask 7168
    %s295 = scalar_lea.vmem %s1, 24
    %296 = vst.msk [vmem:[%s295] sm:$0x1] %vm294, %v293
    %s297 = scalar_lea.vmem %s1, 87
    %298 = vst.msk [vmem:[%s297] sm:$0x2] %vm294, %v293
    %s299 = scalar_lea.vmem %s1, 150
    %300 = vst.msk [vmem:[%s299] sm:$0x4] %vm294, %v293
    %s301 = scalar_lea.vmem %s1, 213
    %302 = vst.msk [vmem:[%s301] sm:$0x8] %vm294, %v293
    %v303 = vld [vmem:[#allocation0] sm:$0xf]
    %304 = vrot.lane.b32.xlu0 %v303, 103
    %v305 = vpop.permute.xlu0 %304
    %vm306 = vcmask 7168
    %s307 = scalar_lea.vmem %s1, 25
    %308 = vst.msk [vmem:[%s307] sm:$0x1] %vm306, %v305
    %s309 = scalar_lea.vmem %s1, 88
    %310 = vst.msk [vmem:[%s309] sm:$0x2] %vm306, %v305
    %s311 = scalar_lea.vmem %s1, 151
    %312 = vst.msk [vmem:[%s311] sm:$0x4] %vm306, %v305
    %s313 = scalar_lea.vmem %s1, 214
    %314 = vst.msk [vmem:[%s313] sm:$0x8] %vm306, %v305
    %v315 = vld [vmem:[#allocation0] sm:$0xf]
    %316 = vrot.lane.b32.xlu0 %v315, 102
    %v317 = vpop.permute.xlu0 %316
    %vm318 = vcmask 7168
    %s319 = scalar_lea.vmem %s1, 26
    %320 = vst.msk [vmem:[%s319] sm:$0x1] %vm318, %v317
    %s321 = scalar_lea.vmem %s1, 89
    %322 = vst.msk [vmem:[%s321] sm:$0x2] %vm318, %v317
    %s323 = scalar_lea.vmem %s1, 152
    %324 = vst.msk [vmem:[%s323] sm:$0x4] %vm318, %v317
    %s325 = scalar_lea.vmem %s1, 215
    %326 = vst.msk [vmem:[%s325] sm:$0x8] %vm318, %v317
    %v327 = vld [vmem:[#allocation0] sm:$0xf]
    %328 = vrot.lane.b32.xlu0 %v327, 101
    %v329 = vpop.permute.xlu0 %328
    %vm330 = vcmask 7168
    %s331 = scalar_lea.vmem %s1, 27
    %332 = vst.msk [vmem:[%s331] sm:$0x1] %vm330, %v329
    %s333 = scalar_lea.vmem %s1, 90
    %334 = vst.msk [vmem:[%s333] sm:$0x2] %vm330, %v329
    %s335 = scalar_lea.vmem %s1, 153
    %336 = vst.msk [vmem:[%s335] sm:$0x4] %vm330, %v329
    %s337 = scalar_lea.vmem %s1, 216
    %338 = vst.msk [vmem:[%s337] sm:$0x8] %vm330, %v329
    %v339 = vld [vmem:[#allocation0] sm:$0xf]
    %340 = vrot.lane.b32.xlu0 %v339, 100
    %v341 = vpop.permute.xlu0 %340
    %vm342 = vcmask 7168
    %s343 = scalar_lea.vmem %s1, 28
    %344 = vst.msk [vmem:[%s343] sm:$0x1] %vm342, %v341
    %s345 = scalar_lea.vmem %s1, 91
    %346 = vst.msk [vmem:[%s345] sm:$0x2] %vm342, %v341
    %s347 = scalar_lea.vmem %s1, 154
    %348 = vst.msk [vmem:[%s347] sm:$0x4] %vm342, %v341
    %s349 = scalar_lea.vmem %s1, 217
    %350 = vst.msk [vmem:[%s349] sm:$0x8] %vm342, %v341
    %v351 = vld [vmem:[#allocation0] sm:$0xf]
    %352 = vrot.lane.b32.xlu0 %v351, 99
    %v353 = vpop.permute.xlu0 %352
    %vm354 = vcmask 7168
    %s355 = scalar_lea.vmem %s1, 29
    %356 = vst.msk [vmem:[%s355] sm:$0x1] %vm354, %v353
    %s357 = scalar_lea.vmem %s1, 92
    %358 = vst.msk [vmem:[%s357] sm:$0x2] %vm354, %v353
    %s359 = scalar_lea.vmem %s1, 155
    %360 = vst.msk [vmem:[%s359] sm:$0x4] %vm354, %v353
    %s361 = scalar_lea.vmem %s1, 218
    %362 = vst.msk [vmem:[%s361] sm:$0x8] %vm354, %v353
    %v363 = vld [vmem:[#allocation0] sm:$0xf]
    %364 = vrot.lane.b32.xlu0 %v363, 98
    %v365 = vpop.permute.xlu0 %364
    %vm366 = vcmask 7168
    %s367 = scalar_lea.vmem %s1, 30
    %368 = vst.msk [vmem:[%s367] sm:$0x1] %vm366, %v365
    %s369 = scalar_lea.vmem %s1, 93
    %370 = vst.msk [vmem:[%s369] sm:$0x2] %vm366, %v365
    %s371 = scalar_lea.vmem %s1, 156
    %372 = vst.msk [vmem:[%s371] sm:$0x4] %vm366, %v365
    %s373 = scalar_lea.vmem %s1, 219
    %374 = vst.msk [vmem:[%s373] sm:$0x8] %vm366, %v365
    %v375 = vld [vmem:[#allocation0] sm:$0xf]
    %376 = vrot.lane.b32.xlu0 %v375, 97
    %v377 = vpop.permute.xlu0 %376
    %vm378 = vcmask 7168
    %s379 = scalar_lea.vmem %s1, 31
    %380 = vst.msk [vmem:[%s379] sm:$0x1] %vm378, %v377
    %s381 = scalar_lea.vmem %s1, 94
    %382 = vst.msk [vmem:[%s381] sm:$0x2] %vm378, %v377
    %s383 = scalar_lea.vmem %s1, 157
    %384 = vst.msk [vmem:[%s383] sm:$0x4] %vm378, %v377
    %s385 = scalar_lea.vmem %s1, 220
    %386 = vst.msk [vmem:[%s385] sm:$0x8] %vm378, %v377
    %v387 = vld [vmem:[#allocation0] sm:$0xf]
    %388 = vrot.lane.b32.xlu0 %v387, 96
    %v389 = vpop.permute.xlu0 %388
    %vm390 = vcmask 7168
    %s391 = scalar_lea.vmem %s1, 32
    %392 = vst.msk [vmem:[%s391] sm:$0x1] %vm390, %v389
    %s393 = scalar_lea.vmem %s1, 95
    %394 = vst.msk [vmem:[%s393] sm:$0x2] %vm390, %v389
    %s395 = scalar_lea.vmem %s1, 158
    %396 = vst.msk [vmem:[%s395] sm:$0x4] %vm390, %v389
    %s397 = scalar_lea.vmem %s1, 221
    %398 = vst.msk [vmem:[%s397] sm:$0x8] %vm390, %v389
    %v399 = vld [vmem:[#allocation0] sm:$0xf]
    %400 = vrot.lane.b32.xlu0 %v399, 95
    %v401 = vpop.permute.xlu0 %400
    %vm402 = vcmask 7168
    %s403 = scalar_lea.vmem %s1, 33
    %404 = vst.msk [vmem:[%s403] sm:$0x1] %vm402, %v401
    %s405 = scalar_lea.vmem %s1, 96
    %406 = vst.msk [vmem:[%s405] sm:$0x2] %vm402, %v401
    %s407 = scalar_lea.vmem %s1, 159
    %408 = vst.msk [vmem:[%s407] sm:$0x4] %vm402, %v401
    %s409 = scalar_lea.vmem %s1, 222
    %410 = vst.msk [vmem:[%s409] sm:$0x8] %vm402, %v401
    %v411 = vld [vmem:[#allocation0] sm:$0xf]
    %412 = vrot.lane.b32.xlu0 %v411, 94
    %v413 = vpop.permute.xlu0 %412
    %vm414 = vcmask 7168
    %s415 = scalar_lea.vmem %s1, 34
    %416 = vst.msk [vmem:[%s415] sm:$0x1] %vm414, %v413
    %s417 = scalar_lea.vmem %s1, 97
    %418 = vst.msk [vmem:[%s417] sm:$0x2] %vm414, %v413
    %s419 = scalar_lea.vmem %s1, 160
    %420 = vst.msk [vmem:[%s419] sm:$0x4] %vm414, %v413
    %s421 = scalar_lea.vmem %s1, 223
    %422 = vst.msk [vmem:[%s421] sm:$0x8] %vm414, %v413
    %v423 = vld [vmem:[#allocation0] sm:$0xf]
    %424 = vrot.lane.b32.xlu0 %v423, 93
    %v425 = vpop.permute.xlu0 %424
    %vm426 = vcmask 7168
    %s427 = scalar_lea.vmem %s1, 35
    %428 = vst.msk [vmem:[%s427] sm:$0x1] %vm426, %v425
    %s429 = scalar_lea.vmem %s1, 98
    %430 = vst.msk [vmem:[%s429] sm:$0x2] %vm426, %v425
    %s431 = scalar_lea.vmem %s1, 161
    %432 = vst.msk [vmem:[%s431] sm:$0x4] %vm426, %v425
    %s433 = scalar_lea.vmem %s1, 224
    %434 = vst.msk [vmem:[%s433] sm:$0x8] %vm426, %v425
    %v435 = vld [vmem:[#allocation0] sm:$0xf]
    %436 = vrot.lane.b32.xlu0 %v435, 92
    %v437 = vpop.permute.xlu0 %436
    %vm438 = vcmask 7168
    %s439 = scalar_lea.vmem %s1, 36
    %440 = vst.msk [vmem:[%s439] sm:$0x1] %vm438, %v437
    %s441 = scalar_lea.vmem %s1, 99
    %442 = vst.msk [vmem:[%s441] sm:$0x2] %vm438, %v437
    %s443 = scalar_lea.vmem %s1, 162
    %444 = vst.msk [vmem:[%s443] sm:$0x4] %vm438, %v437
    %s445 = scalar_lea.vmem %s1, 225
    %446 = vst.msk [vmem:[%s445] sm:$0x8] %vm438, %v437
    %v447 = vld [vmem:[#allocation0] sm:$0xf]
    %448 = vrot.lane.b32.xlu0 %v447, 91
    %v449 = vpop.permute.xlu0 %448
    %vm450 = vcmask 7168
    %s451 = scalar_lea.vmem %s1, 37
    %452 = vst.msk [vmem:[%s451] sm:$0x1] %vm450, %v449
    %s453 = scalar_lea.vmem %s1, 100
    %454 = vst.msk [vmem:[%s453] sm:$0x2] %vm450, %v449
    %s455 = scalar_lea.vmem %s1, 163
    %456 = vst.msk [vmem:[%s455] sm:$0x4] %vm450, %v449
    %s457 = scalar_lea.vmem %s1, 226
    %458 = vst.msk [vmem:[%s457] sm:$0x8] %vm450, %v449
    %v459 = vld [vmem:[#allocation0] sm:$0xf]
    %460 = vrot.lane.b32.xlu0 %v459, 90
    %v461 = vpop.permute.xlu0 %460
    %vm462 = vcmask 7168
    %s463 = scalar_lea.vmem %s1, 38
    %464 = vst.msk [vmem:[%s463] sm:$0x1] %vm462, %v461
    %s465 = scalar_lea.vmem %s1, 101
    %466 = vst.msk [vmem:[%s465] sm:$0x2] %vm462, %v461
    %s467 = scalar_lea.vmem %s1, 164
    %468 = vst.msk [vmem:[%s467] sm:$0x4] %vm462, %v461
    %s469 = scalar_lea.vmem %s1, 227
    %470 = vst.msk [vmem:[%s469] sm:$0x8] %vm462, %v461
    %v471 = vld [vmem:[#allocation0] sm:$0xf]
    %472 = vrot.lane.b32.xlu0 %v471, 89
    %v473 = vpop.permute.xlu0 %472
    %vm474 = vcmask 7168
    %s475 = scalar_lea.vmem %s1, 39
    %476 = vst.msk [vmem:[%s475] sm:$0x1] %vm474, %v473
    %s477 = scalar_lea.vmem %s1, 102
    %478 = vst.msk [vmem:[%s477] sm:$0x2] %vm474, %v473
    %s479 = scalar_lea.vmem %s1, 165
    %480 = vst.msk [vmem:[%s479] sm:$0x4] %vm474, %v473
    %s481 = scalar_lea.vmem %s1, 228
    %482 = vst.msk [vmem:[%s481] sm:$0x8] %vm474, %v473
    %v483 = vld [vmem:[#allocation0] sm:$0xf]
    %484 = vrot.lane.b32.xlu0 %v483, 88
    %v485 = vpop.permute.xlu0 %484
    %vm486 = vcmask 7168
    %s487 = scalar_lea.vmem %s1, 40
    %488 = vst.msk [vmem:[%s487] sm:$0x1] %vm486, %v485
    %s489 = scalar_lea.vmem %s1, 103
    %490 = vst.msk [vmem:[%s489] sm:$0x2] %vm486, %v485
    %s491 = scalar_lea.vmem %s1, 166
    %492 = vst.msk [vmem:[%s491] sm:$0x4] %vm486, %v485
    %s493 = scalar_lea.vmem %s1, 229
    %494 = vst.msk [vmem:[%s493] sm:$0x8] %vm486, %v485
    %v495 = vld [vmem:[#allocation0] sm:$0xf]
    %496 = vrot.lane.b32.xlu0 %v495, 87
    %v497 = vpop.permute.xlu0 %496
    %vm498 = vcmask 7168
    %s499 = scalar_lea.vmem %s1, 41
    %500 = vst.msk [vmem:[%s499] sm:$0x1] %vm498, %v497
    %s501 = scalar_lea.vmem %s1, 104
    %502 = vst.msk [vmem:[%s501] sm:$0x2] %vm498, %v497
    %s503 = scalar_lea.vmem %s1, 167
    %504 = vst.msk [vmem:[%s503] sm:$0x4] %vm498, %v497
    %s505 = scalar_lea.vmem %s1, 230
    %506 = vst.msk [vmem:[%s505] sm:$0x8] %vm498, %v497
    %v507 = vld [vmem:[#allocation0] sm:$0xf]
    %508 = vrot.lane.b32.xlu0 %v507, 86
    %v509 = vpop.permute.xlu0 %508
    %vm510 = vcmask 7168
    %s511 = scalar_lea.vmem %s1, 42
    %512 = vst.msk [vmem:[%s511] sm:$0x1] %vm510, %v509
    %s513 = scalar_lea.vmem %s1, 105
    %514 = vst.msk [vmem:[%s513] sm:$0x2] %vm510, %v509
    %s515 = scalar_lea.vmem %s1, 168
    %516 = vst.msk [vmem:[%s515] sm:$0x4] %vm510, %v509
    %s517 = scalar_lea.vmem %s1, 231
    %518 = vst.msk [vmem:[%s517] sm:$0x8] %vm510, %v509
    %v519 = vld [vmem:[#allocation0] sm:$0xf]
    %520 = vrot.lane.b32.xlu0 %v519, 85
    %v521 = vpop.permute.xlu0 %520
    %vm522 = vcmask 7168
    %s523 = scalar_lea.vmem %s1, 43
    %524 = vst.msk [vmem:[%s523] sm:$0x1] %vm522, %v521
    %s525 = scalar_lea.vmem %s1, 106
    %526 = vst.msk [vmem:[%s525] sm:$0x2] %vm522, %v521
    %s527 = scalar_lea.vmem %s1, 169
    %528 = vst.msk [vmem:[%s527] sm:$0x4] %vm522, %v521
    %s529 = scalar_lea.vmem %s1, 232
    %530 = vst.msk [vmem:[%s529] sm:$0x8] %vm522, %v521
    %v531 = vld [vmem:[#allocation0] sm:$0xf]
    %532 = vrot.lane.b32.xlu0 %v531, 84
    %v533 = vpop.permute.xlu0 %532
    %vm534 = vcmask 7168
    %s535 = scalar_lea.vmem %s1, 44
    %536 = vst.msk [vmem:[%s535] sm:$0x1] %vm534, %v533
    %s537 = scalar_lea.vmem %s1, 107
    %538 = vst.msk [vmem:[%s537] sm:$0x2] %vm534, %v533
    %s539 = scalar_lea.vmem %s1, 170
    %540 = vst.msk [vmem:[%s539] sm:$0x4] %vm534, %v533
    %s541 = scalar_lea.vmem %s1, 233
    %542 = vst.msk [vmem:[%s541] sm:$0x8] %vm534, %v533
    %v543 = vld [vmem:[#allocation0] sm:$0xf]
    %544 = vrot.lane.b32.xlu0 %v543, 83
    %v545 = vpop.permute.xlu0 %544
    %vm546 = vcmask 7168
    %s547 = scalar_lea.vmem %s1, 45
    %548 = vst.msk [vmem:[%s547] sm:$0x1] %vm546, %v545
    %s549 = scalar_lea.vmem %s1, 108
    %550 = vst.msk [vmem:[%s549] sm:$0x2] %vm546, %v545
    %s551 = scalar_lea.vmem %s1, 171
    %552 = vst.msk [vmem:[%s551] sm:$0x4] %vm546, %v545
    %s553 = scalar_lea.vmem %s1, 234
    %554 = vst.msk [vmem:[%s553] sm:$0x8] %vm546, %v545
    %v555 = vld [vmem:[#allocation0] sm:$0xf]
    %556 = vrot.lane.b32.xlu0 %v555, 82
    %v557 = vpop.permute.xlu0 %556
    %vm558 = vcmask 7168
    %s559 = scalar_lea.vmem %s1, 46
    %560 = vst.msk [vmem:[%s559] sm:$0x1] %vm558, %v557
    %s561 = scalar_lea.vmem %s1, 109
    %562 = vst.msk [vmem:[%s561] sm:$0x2] %vm558, %v557
    %s563 = scalar_lea.vmem %s1, 172
    %564 = vst.msk [vmem:[%s563] sm:$0x4] %vm558, %v557
    %s565 = scalar_lea.vmem %s1, 235
    %566 = vst.msk [vmem:[%s565] sm:$0x8] %vm558, %v557
    %v567 = vld [vmem:[#allocation0] sm:$0xf]
    %568 = vrot.lane.b32.xlu0 %v567, 81
    %v569 = vpop.permute.xlu0 %568
    %vm570 = vcmask 7168
    %s571 = scalar_lea.vmem %s1, 47
    %572 = vst.msk [vmem:[%s571] sm:$0x1] %vm570, %v569
    %s573 = scalar_lea.vmem %s1, 110
    %574 = vst.msk [vmem:[%s573] sm:$0x2] %vm570, %v569
    %s575 = scalar_lea.vmem %s1, 173
    %576 = vst.msk [vmem:[%s575] sm:$0x4] %vm570, %v569
    %s577 = scalar_lea.vmem %s1, 236
    %578 = vst.msk [vmem:[%s577] sm:$0x8] %vm570, %v569
    %v579 = vld [vmem:[#allocation0] sm:$0xf]
    %580 = vrot.lane.b32.xlu0 %v579, 80
    %v581 = vpop.permute.xlu0 %580
    %vm582 = vcmask 7168
    %s583 = scalar_lea.vmem %s1, 48
    %584 = vst.msk [vmem:[%s583] sm:$0x1] %vm582, %v581
    %s585 = scalar_lea.vmem %s1, 111
    %586 = vst.msk [vmem:[%s585] sm:$0x2] %vm582, %v581
    %s587 = scalar_lea.vmem %s1, 174
    %588 = vst.msk [vmem:[%s587] sm:$0x4] %vm582, %v581
    %s589 = scalar_lea.vmem %s1, 237
    %590 = vst.msk [vmem:[%s589] sm:$0x8] %vm582, %v581
    %v591 = vld [vmem:[#allocation0] sm:$0xf]
    %592 = vrot.lane.b32.xlu0 %v591, 79
    %v593 = vpop.permute.xlu0 %592
    %vm594 = vcmask 7168
    %s595 = scalar_lea.vmem %s1, 49
    %596 = vst.msk [vmem:[%s595] sm:$0x1] %vm594, %v593
    %s597 = scalar_lea.vmem %s1, 112
    %598 = vst.msk [vmem:[%s597] sm:$0x2] %vm594, %v593
    %s599 = scalar_lea.vmem %s1, 175
    %600 = vst.msk [vmem:[%s599] sm:$0x4] %vm594, %v593
    %s601 = scalar_lea.vmem %s1, 238
    %602 = vst.msk [vmem:[%s601] sm:$0x8] %vm594, %v593
    %v603 = vld [vmem:[#allocation0] sm:$0xf]
    %604 = vrot.lane.b32.xlu0 %v603, 78
    %v605 = vpop.permute.xlu0 %604
    %vm606 = vcmask 7168
    %s607 = scalar_lea.vmem %s1, 50
    %608 = vst.msk [vmem:[%s607] sm:$0x1] %vm606, %v605
    %s609 = scalar_lea.vmem %s1, 113
    %610 = vst.msk [vmem:[%s609] sm:$0x2] %vm606, %v605
    %s611 = scalar_lea.vmem %s1, 176
    %612 = vst.msk [vmem:[%s611] sm:$0x4] %vm606, %v605
    %s613 = scalar_lea.vmem %s1, 239
    %614 = vst.msk [vmem:[%s613] sm:$0x8] %vm606, %v605
    %v615 = vld [vmem:[#allocation0] sm:$0xf]
    %616 = vrot.lane.b32.xlu0 %v615, 77
    %v617 = vpop.permute.xlu0 %616
    %vm618 = vcmask 7168
    %s619 = scalar_lea.vmem %s1, 51
    %620 = vst.msk [vmem:[%s619] sm:$0x1] %vm618, %v617
    %s621 = scalar_lea.vmem %s1, 114
    %622 = vst.msk [vmem:[%s621] sm:$0x2] %vm618, %v617
    %s623 = scalar_lea.vmem %s1, 177
    %624 = vst.msk [vmem:[%s623] sm:$0x4] %vm618, %v617
    %s625 = scalar_lea.vmem %s1, 240
    %626 = vst.msk [vmem:[%s625] sm:$0x8] %vm618, %v617
    %v627 = vld [vmem:[#allocation0] sm:$0xf]
    %628 = vrot.lane.b32.xlu0 %v627, 76
    %v629 = vpop.permute.xlu0 %628
    %vm630 = vcmask 7168
    %s631 = scalar_lea.vmem %s1, 52
    %632 = vst.msk [vmem:[%s631] sm:$0x1] %vm630, %v629
    %s633 = scalar_lea.vmem %s1, 115
    %634 = vst.msk [vmem:[%s633] sm:$0x2] %vm630, %v629
    %s635 = scalar_lea.vmem %s1, 178
    %636 = vst.msk [vmem:[%s635] sm:$0x4] %vm630, %v629
    %s637 = scalar_lea.vmem %s1, 241
    %638 = vst.msk [vmem:[%s637] sm:$0x8] %vm630, %v629
    %v639 = vld [vmem:[#allocation0] sm:$0xf]
    %640 = vrot.lane.b32.xlu0 %v639, 75
    %v641 = vpop.permute.xlu0 %640
    %vm642 = vcmask 7168
    %s643 = scalar_lea.vmem %s1, 53
    %644 = vst.msk [vmem:[%s643] sm:$0x1] %vm642, %v641
    %s645 = scalar_lea.vmem %s1, 116
    %646 = vst.msk [vmem:[%s645] sm:$0x2] %vm642, %v641
    %s647 = scalar_lea.vmem %s1, 179
    %648 = vst.msk [vmem:[%s647] sm:$0x4] %vm642, %v641
    %s649 = scalar_lea.vmem %s1, 242
    %650 = vst.msk [vmem:[%s649] sm:$0x8] %vm642, %v641
    %v651 = vld [vmem:[#allocation0] sm:$0xf]
    %652 = vrot.lane.b32.xlu0 %v651, 74
    %v653 = vpop.permute.xlu0 %652
    %vm654 = vcmask 7168
    %s655 = scalar_lea.vmem %s1, 54
    %656 = vst.msk [vmem:[%s655] sm:$0x1] %vm654, %v653
    %s657 = scalar_lea.vmem %s1, 117
    %658 = vst.msk [vmem:[%s657] sm:$0x2] %vm654, %v653
    %s659 = scalar_lea.vmem %s1, 180
    %660 = vst.msk [vmem:[%s659] sm:$0x4] %vm654, %v653
    %s661 = scalar_lea.vmem %s1, 243
    %662 = vst.msk [vmem:[%s661] sm:$0x8] %vm654, %v653
    %v663 = vld [vmem:[#allocation0] sm:$0xf]
    %664 = vrot.lane.b32.xlu0 %v663, 73
    %v665 = vpop.permute.xlu0 %664
    %vm666 = vcmask 7168
    %s667 = scalar_lea.vmem %s1, 55
    %668 = vst.msk [vmem:[%s667] sm:$0x1] %vm666, %v665
    %s669 = scalar_lea.vmem %s1, 118
    %670 = vst.msk [vmem:[%s669] sm:$0x2] %vm666, %v665
    %s671 = scalar_lea.vmem %s1, 181
    %672 = vst.msk [vmem:[%s671] sm:$0x4] %vm666, %v665
    %s673 = scalar_lea.vmem %s1, 244
    %674 = vst.msk [vmem:[%s673] sm:$0x8] %vm666, %v665
    %v675 = vld [vmem:[#allocation0] sm:$0xf]
    %676 = vrot.lane.b32.xlu0 %v675, 72
    %v677 = vpop.permute.xlu0 %676
    %vm678 = vcmask 7168
    %s679 = scalar_lea.vmem %s1, 56
    %680 = vst.msk [vmem:[%s679] sm:$0x1] %vm678, %v677
    %s681 = scalar_lea.vmem %s1, 119
    %682 = vst.msk [vmem:[%s681] sm:$0x2] %vm678, %v677
    %s683 = scalar_lea.vmem %s1, 182
    %684 = vst.msk [vmem:[%s683] sm:$0x4] %vm678, %v677
    %s685 = scalar_lea.vmem %s1, 245
    %686 = vst.msk [vmem:[%s685] sm:$0x8] %vm678, %v677
    %v687 = vld [vmem:[#allocation0] sm:$0xf]
    %688 = vrot.lane.b32.xlu0 %v687, 71
    %v689 = vpop.permute.xlu0 %688
    %vm690 = vcmask 7168
    %s691 = scalar_lea.vmem %s1, 57
    %692 = vst.msk [vmem:[%s691] sm:$0x1] %vm690, %v689
    %s693 = scalar_lea.vmem %s1, 120
    %694 = vst.msk [vmem:[%s693] sm:$0x2] %vm690, %v689
    %s695 = scalar_lea.vmem %s1, 183
    %696 = vst.msk [vmem:[%s695] sm:$0x4] %vm690, %v689
    %s697 = scalar_lea.vmem %s1, 246
    %698 = vst.msk [vmem:[%s697] sm:$0x8] %vm690, %v689
    %v699 = vld [vmem:[#allocation0] sm:$0xf]
    %700 = vrot.lane.b32.xlu0 %v699, 70
    %v701 = vpop.permute.xlu0 %700
    %vm702 = vcmask 7168
    %s703 = scalar_lea.vmem %s1, 58
    %704 = vst.msk [vmem:[%s703] sm:$0x1] %vm702, %v701
    %s705 = scalar_lea.vmem %s1, 121
    %706 = vst.msk [vmem:[%s705] sm:$0x2] %vm702, %v701
    %s707 = scalar_lea.vmem %s1, 184
    %708 = vst.msk [vmem:[%s707] sm:$0x4] %vm702, %v701
    %s709 = scalar_lea.vmem %s1, 247
    %710 = vst.msk [vmem:[%s709] sm:$0x8] %vm702, %v701
    %v711 = vld [vmem:[#allocation0] sm:$0xf]
    %712 = vrot.lane.b32.xlu0 %v711, 69
    %v713 = vpop.permute.xlu0 %712
    %vm714 = vcmask 7168
    %s715 = scalar_lea.vmem %s1, 59
    %716 = vst.msk [vmem:[%s715] sm:$0x1] %vm714, %v713
    %s717 = scalar_lea.vmem %s1, 122
    %718 = vst.msk [vmem:[%s717] sm:$0x2] %vm714, %v713
    %s719 = scalar_lea.vmem %s1, 185
    %720 = vst.msk [vmem:[%s719] sm:$0x4] %vm714, %v713
    %s721 = scalar_lea.vmem %s1, 248
    %722 = vst.msk [vmem:[%s721] sm:$0x8] %vm714, %v713
    %v723 = vld [vmem:[#allocation0] sm:$0xf]
    %724 = vrot.lane.b32.xlu0 %v723, 68
    %v725 = vpop.permute.xlu0 %724
    %vm726 = vcmask 7168
    %s727 = scalar_lea.vmem %s1, 60
    %728 = vst.msk [vmem:[%s727] sm:$0x1] %vm726, %v725
    %s729 = scalar_lea.vmem %s1, 123
    %730 = vst.msk [vmem:[%s729] sm:$0x2] %vm726, %v725
    %s731 = scalar_lea.vmem %s1, 186
    %732 = vst.msk [vmem:[%s731] sm:$0x4] %vm726, %v725
    %s733 = scalar_lea.vmem %s1, 249
    %734 = vst.msk [vmem:[%s733] sm:$0x8] %vm726, %v725
    %v735 = vld [vmem:[#allocation0] sm:$0xf]
    %736 = vrot.lane.b32.xlu0 %v735, 67
    %v737 = vpop.permute.xlu0 %736
    %vm738 = vcmask 7168
    %s739 = scalar_lea.vmem %s1, 61
    %740 = vst.msk [vmem:[%s739] sm:$0x1] %vm738, %v737
    %s741 = scalar_lea.vmem %s1, 124
    %742 = vst.msk [vmem:[%s741] sm:$0x2] %vm738, %v737
    %s743 = scalar_lea.vmem %s1, 187
    %744 = vst.msk [vmem:[%s743] sm:$0x4] %vm738, %v737
    %s745 = scalar_lea.vmem %s1, 250
    %746 = vst.msk [vmem:[%s745] sm:$0x8] %vm738, %v737
    %v747 = vld [vmem:[#allocation0] sm:$0xf]
    %748 = vrot.lane.b32.xlu0 %v747, 66
    %v749 = vpop.permute.xlu0 %748
    %vm750 = vcmask 7168
    %s751 = scalar_lea.vmem %s1, 62
    %752 = vst.msk [vmem:[%s751] sm:$0x1] %vm750, %v749
    %s753 = scalar_lea.vmem %s1, 125
    %754 = vst.msk [vmem:[%s753] sm:$0x2] %vm750, %v749
    %s755 = scalar_lea.vmem %s1, 188
    %756 = vst.msk [vmem:[%s755] sm:$0x4] %vm750, %v749
    %s757 = scalar_lea.vmem %s1, 251
    %758 = vst.msk [vmem:[%s757] sm:$0x8] %vm750, %v749
    %v759 = vld [vmem:[#allocation0] sm:$0xf]
    %760 = vrot.lane.b32.xlu0 %v759, 65
    %v761 = vpop.permute.xlu0 %760
    %vm762 = vcmask 7168
    %s763 = scalar_lea.vmem %s1, 63
    %764 = vst.msk [vmem:[%s763] sm:$0x1] %vm762, %v761
    %s765 = scalar_lea.vmem %s1, 126
    %766 = vst.msk [vmem:[%s765] sm:$0x2] %vm762, %v761
    %s767 = scalar_lea.vmem %s1, 189
    %768 = vst.msk [vmem:[%s767] sm:$0x4] %vm762, %v761
    %s769 = scalar_lea.vmem %s1, 252
    %770 = vst.msk [vmem:[%s769] sm:$0x8] %vm762, %v761

// kernel: avgpool_conv2d_bn_relu.1
$region0: #{avgpool_conv2d_bn_relu.1}
  #allocation0 [shape = 'u32[]', space=smem, size = 0x4, offset = 0x4, fixed_abs, tag = 'smem constant byte address 0x4 - core index']
  #allocation1 [shape = 'u32[72,128]{1,0:T(1,128)}', space=vmem, size = 0x9000, scoped, tag = 'internal scratch']
  %s0 = inlined_call_operand.vmem [shape: f32[16,128], index: 0, kind: input, shape index: {}]
  %s1 = inlined_call_operand.vmem [shape: f32[256,16], index: 1, kind: input, shape index: {}]
  %s2 = inlined_call_operand.vmem [shape: f32[256,1], index: 2, kind: input, shape index: {}]
  %s3 = inlined_call_operand.vmem [shape: f32[64,1], index: 3, kind: input, shape index: {}]
  %s4 = inlined_call_operand.vmem [shape: f32[64,1], index: 4, kind: input, shape index: {}]
  %s5 = inlined_call_operand.vmem [shape: f32[64,128], index: 5, kind: output, shape index: {}]
  %s6 = sld [smem:[#allocation0]]
  $region30: #{avgpool_conv2d_bn_relu.1} parent=0
    _
  %s8 = ssub.s32 1, %s6
  %s9 = scalar_select 0, %s8, %s6
  // Predicated region
  $region2: #{avgpool_conv2d_bn_relu.1} parent=0 // pred_check
    _
  $region3: #{avgpool_conv2d_bn_relu.1} parent=0 // pred_check_branch
    %11 = sbr.rel (0) target = $region5
  $region4: #{avgpool_conv2d_bn_relu.1} parent=0 // pred_region
    _
  $region5: #{avgpool_conv2d_bn_relu.1} parent=0 // pred_fallthru
    _
  // Predicated region
  $region6: #{avgpool_conv2d_bn_relu.1} parent=0 // pred_check
    _
  $region7: #{avgpool_conv2d_bn_relu.1} parent=0 // pred_check_branch
    %13 = sbr.rel (0) target = $region9
  $region8: #{avgpool_conv2d_bn_relu.1} parent=0 // pred_region
    _
  $region9: #{avgpool_conv2d_bn_relu.1} parent=0 // pred_fallthru
    _
  // Predicated region
  $region10: #{avgpool_conv2d_bn_relu.1} parent=0 // pred_check
    _
  $region11: #{avgpool_conv2d_bn_relu.1} parent=0 // pred_check_branch
    %15 = sbr.rel (0) target = $region13
  $region12: #{avgpool_conv2d_bn_relu.1} parent=0 // pred_region
    _
  $region13: #{avgpool_conv2d_bn_relu.1} parent=0 // pred_fallthru
    _
  // Predicated region
  $region14: #{avgpool_conv2d_bn_relu.1} parent=0 // pred_check
    _
  $region15: #{avgpool_conv2d_bn_relu.1} parent=0 // pred_check_branch
    %17 = sbr.rel (0) target = $region17
  $region16: #{avgpool_conv2d_bn_relu.1} parent=0 // pred_region
    _
  $region17: #{avgpool_conv2d_bn_relu.1} parent=0 // pred_fallthru
    _
  // Predicated region
  $region18: #{avgpool_conv2d_bn_relu.1} parent=0 // pred_check
    _
  $region19: #{avgpool_conv2d_bn_relu.1} parent=0 // pred_check_branch
    %19 = sbr.rel (0) target = $region21
  $region20: #{avgpool_conv2d_bn_relu.1} parent=0 // pred_region
    _
  $region21: #{avgpool_conv2d_bn_relu.1} parent=0 // pred_fallthru
    _
  %v20 = vld [vmem:[%s1] sm:$0xff]
  %v21 = vld [vmem:[%s1 + $0x8] sm:$0xff]
  %v22 = vld [vmem:[%s1 + $0x10] sm:$0xff]
  %v23 = vld [vmem:[%s1 + $0x18] sm:$0xff]
  %v24 = vld [vmem:[%s1 + $0x20] sm:$0xff]
  %v25 = vld [vmem:[%s1 + $0x28] sm:$0xff]
  %v26 = vld [vmem:[%s1 + $0x30] sm:$0xff]
  %v27 = vld [vmem:[%s1 + $0x38] sm:$0xff]
  %v28 = vld [vmem:[%s1 + $0x40] sm:$0xff]
  %v29 = vld [vmem:[%s1 + $0x48] sm:$0xff]
  %v30 = vld [vmem:[%s1 + $0x50] sm:$0xff]
  %v31 = vld [vmem:[%s1 + $0x58] sm:$0xff]
  %v32 = vld [vmem:[%s1 + $0x60] sm:$0xff]
  %v33 = vld [vmem:[%s1 + $0x68] sm:$0xff]
  %v34 = vld [vmem:[%s1 + $0x70] sm:$0xff]
  %v35 = vld [vmem:[%s1 + $0x78] sm:$0xff]
  %v36 = vld [vmem:[%s1 + $0x80] sm:$0xff]
  %v37 = vld [vmem:[%s1 + $0x88] sm:$0xff]
  %v38 = vld [vmem:[%s1 + $0x90] sm:$0xff]
  %v39 = vld [vmem:[%s1 + $0x98] sm:$0xff]
  %v40 = vld [vmem:[%s1 + $0xa0] sm:$0xff]
  %v41 = vld [vmem:[%s1 + $0xa8] sm:$0xff]
  %v42 = vld [vmem:[%s1 + $0xb0] sm:$0xff]
  %v43 = vld [vmem:[%s1 + $0xb8] sm:$0xff]
  %v44 = vld [vmem:[%s1 + $0xc0] sm:$0xff]
  %v45 = vld [vmem:[%s1 + $0xc8] sm:$0xff]
  %v46 = vld [vmem:[%s1 + $0xd0] sm:$0xff]
  %v47 = vld [vmem:[%s1 + $0xd8] sm:$0xff]
  %v48 = vld [vmem:[%s1 + $0xe0] sm:$0xff]
  %v49 = vld [vmem:[%s1 + $0xe8] sm:$0xff]
  %v50 = vld [vmem:[%s1 + $0xf0] sm:$0xff]
  %v51 = vld [vmem:[%s1 + $0xf8] sm:$0xff]
  %v52 = vld [vmem:[%s0] sm:$0xff]
  %v53 = vld [vmem:[%s0 + $0x8] sm:$0xff]
  %v54 = vld [vmem:[%s2] sm:$0xff]
  %v55 = vld [vmem:[%s2 + $0x8] sm:$0xff]
  %v56 = vld [vmem:[%s2 + $0x10] sm:$0xff]
  %v57 = vld [vmem:[%s2 + $0x18] sm:$0xff]
  %v58 = vld [vmem:[%s2 + $0x20] sm:$0xff]
  %v59 = vld [vmem:[%s2 + $0x28] sm:$0xff]
  %v60 = vld [vmem:[%s2 + $0x30] sm:$0xff]
  %v61 = vld [vmem:[%s2 + $0x38] sm:$0xff]
  %v62 = vld [vmem:[%s2 + $0x40] sm:$0xff]
  %v63 = vld [vmem:[%s2 + $0x48] sm:$0xff]
  %v64 = vld [vmem:[%s2 + $0x50] sm:$0xff]
  %v65 = vld [vmem:[%s2 + $0x58] sm:$0xff]
  %v66 = vld [vmem:[%s2 + $0x60] sm:$0xff]
  %v67 = vld [vmem:[%s2 + $0x68] sm:$0xff]
  %v68 = vld [vmem:[%s2 + $0x70] sm:$0xff]
  %v69 = vld [vmem:[%s2 + $0x78] sm:$0xff]
  %v70 = vld [vmem:[%s2 + $0x80] sm:$0xff]
  %v71 = vld [vmem:[%s2 + $0x88] sm:$0xff]
  %v72 = vld [vmem:[%s2 + $0x90] sm:$0xff]
  %v73 = vld [vmem:[%s2 + $0x98] sm:$0xff]
  %v74 = vld [vmem:[%s2 + $0xa0] sm:$0xff]
  %v75 = vld [vmem:[%s2 + $0xa8] sm:$0xff]
  %v76 = vld [vmem:[%s2 + $0xb0] sm:$0xff]
  %v77 = vld [vmem:[%s2 + $0xb8] sm:$0xff]
  %v78 = vld [vmem:[%s2 + $0xc0] sm:$0xff]
  %v79 = vld [vmem:[%s2 + $0xc8] sm:$0xff]
  %v80 = vld [vmem:[%s2 + $0xd0] sm:$0xff]
  %v81 = vld [vmem:[%s2 + $0xd8] sm:$0xff]
  %v82 = vld [vmem:[%s2 + $0xe0] sm:$0xff]
  %v83 = vld [vmem:[%s2 + $0xe8] sm:$0xff]
  %v84 = vld [vmem:[%s2 + $0xf0] sm:$0xff]
  %v85 = vld [vmem:[%s2 + $0xf8] sm:$0xff]
  %87 = vset.pattern.permute.xlu0 0
  %88 = vperm.xlu0 %87, %v54
  %v89 = vpop.permute.xlu0 %88
  %92 = vset.pattern.permute.xlu0 0
  %93 = vperm.xlu0 %92, %v55
  %v94 = vpop.permute.xlu0 %93
  %97 = vset.pattern.permute.xlu0 0
  %98 = vperm.xlu0 %97, %v56
  %v99 = vpop.permute.xlu0 %98
  %102 = vset.pattern.permute.xlu0 0
  %103 = vperm.xlu0 %102, %v57
  %v104 = vpop.permute.xlu0 %103
  %107 = vset.pattern.permute.xlu0 0
  %108 = vperm.xlu0 %107, %v58
  %v109 = vpop.permute.xlu0 %108
  %112 = vset.pattern.permute.xlu0 0
  %113 = vperm.xlu0 %112, %v59
  %v114 = vpop.permute.xlu0 %113
  %117 = vset.pattern.permute.xlu0 0
  %118 = vperm.xlu0 %117, %v60
  %v119 = vpop.permute.xlu0 %118
  %122 = vset.pattern.permute.xlu0 0
  %123 = vperm.xlu0 %122, %v61
  %v124 = vpop.permute.xlu0 %123
  %127 = vset.pattern.permute.xlu0 0
  %128 = vperm.xlu0 %127, %v62
  %v129 = vpop.permute.xlu0 %128
  %132 = vset.pattern.permute.xlu0 0
  %133 = vperm.xlu0 %132, %v63
  %v134 = vpop.permute.xlu0 %133
  %137 = vset.pattern.permute.xlu0 0
  %138 = vperm.xlu0 %137, %v64
  %v139 = vpop.permute.xlu0 %138
  %142 = vset.pattern.permute.xlu0 0
  %143 = vperm.xlu0 %142, %v65
  %v144 = vpop.permute.xlu0 %143
  %147 = vset.pattern.permute.xlu0 0
  %148 = vperm.xlu0 %147, %v66
  %v149 = vpop.permute.xlu0 %148
  %152 = vset.pattern.permute.xlu0 0
  %153 = vperm.xlu0 %152, %v67
  %v154 = vpop.permute.xlu0 %153
  %157 = vset.pattern.permute.xlu0 0
  %158 = vperm.xlu0 %157, %v68
  %v159 = vpop.permute.xlu0 %158
  %162 = vset.pattern.permute.xlu0 0
  %163 = vperm.xlu0 %162, %v69
  %v164 = vpop.permute.xlu0 %163
  %167 = vset.pattern.permute.xlu0 0
  %168 = vperm.xlu0 %167, %v70
  %v169 = vpop.permute.xlu0 %168
  %172 = vset.pattern.permute.xlu0 0
  %173 = vperm.xlu0 %172, %v71
  %v174 = vpop.permute.xlu0 %173
  %177 = vset.pattern.permute.xlu0 0
  %178 = vperm.xlu0 %177, %v72
  %v179 = vpop.permute.xlu0 %178
  %182 = vset.pattern.permute.xlu0 0
  %183 = vperm.xlu0 %182, %v73
  %v184 = vpop.permute.xlu0 %183
  %187 = vset.pattern.permute.xlu0 0
  %188 = vperm.xlu0 %187, %v74
  %v189 = vpop.permute.xlu0 %188
  %192 = vset.pattern.permute.xlu0 0
  %193 = vperm.xlu0 %192, %v75
  %v194 = vpop.permute.xlu0 %193
  %197 = vset.pattern.permute.xlu0 0
  %198 = vperm.xlu0 %197, %v76
  %v199 = vpop.permute.xlu0 %198
  %202 = vset.pattern.permute.xlu0 0
  %203 = vperm.xlu0 %202, %v77
  %v204 = vpop.permute.xlu0 %203
  %207 = vset.pattern.permute.xlu0 0
  %208 = vperm.xlu0 %207, %v78
  %v209 = vpop.permute.xlu0 %208
  %212 = vset.pattern.permute.xlu0 0
  %213 = vperm.xlu0 %212, %v79
  %v214 = vpop.permute.xlu0 %213
  %217 = vset.pattern.permute.xlu0 0
  %218 = vperm.xlu0 %217, %v80
  %v219 = vpop.permute.xlu0 %218
  %222 = vset.pattern.permute.xlu0 0
  %223 = vperm.xlu0 %222, %v81
  %v224 = vpop.permute.xlu0 %223
  %227 = vset.pattern.permute.xlu0 0
  %228 = vperm.xlu0 %227, %v82
  %v229 = vpop.permute.xlu0 %228
  %232 = vset.pattern.permute.xlu0 0
  %233 = vperm.xlu0 %232, %v83
  %v234 = vpop.permute.xlu0 %233
  %237 = vset.pattern.permute.xlu0 0
  %238 = vperm.xlu0 %237, %v84
  %v239 = vpop.permute.xlu0 %238
  %242 = vset.pattern.permute.xlu0 0
  %243 = vperm.xlu0 %242, %v85
  %v244 = vpop.permute.xlu0 %243
  %vm246 = vcmask 130048
  %v248 = vsel %vm246, %v20, 0
  %v251 = vsel %vm246, %v21, 0
  %v254 = vsel %vm246, %v22, 0
  %v257 = vsel %vm246, %v23, 0
  %v260 = vsel %vm246, %v24, 0
  %v263 = vsel %vm246, %v25, 0
  %v266 = vsel %vm246, %v26, 0
  %v269 = vsel %vm246, %v27, 0
  %v272 = vsel %vm246, %v28, 0
  %v275 = vsel %vm246, %v29, 0
  %v278 = vsel %vm246, %v30, 0
  %v281 = vsel %vm246, %v31, 0
  %v284 = vsel %vm246, %v32, 0
  %v287 = vsel %vm246, %v33, 0
  %v290 = vsel %vm246, %v34, 0
  %v293 = vsel %vm246, %v35, 0
  %v296 = vsel %vm246, %v36, 0
  %v299 = vsel %vm246, %v37, 0
  %v302 = vsel %vm246, %v38, 0
  %v305 = vsel %vm246, %v39, 0
  %v308 = vsel %vm246, %v40, 0
  %v311 = vsel %vm246, %v41, 0
  %v314 = vsel %vm246, %v42, 0
  %v317 = vsel %vm246, %v43, 0
  %v320 = vsel %vm246, %v44, 0
  %v323 = vsel %vm246, %v45, 0
  %v326 = vsel %vm246, %v46, 0
  %v329 = vsel %vm246, %v47, 0
  %v332 = vsel %vm246, %v48, 0
  %v335 = vsel %vm246, %v49, 0
  %v338 = vsel %vm246, %v50, 0
  %v341 = vsel %vm246, %v51, 0
  %343 = vmatpush.msra.mxu0 0.0
  %344 = vmatpush.msra.mxu0 0.0
  %345 = vmatpush.msra.mxu0 0.0
  %346 = vmatpush.msra.mxu0 0.0
  %347 = vmatpush.msra.mxu0 0.0
  %348 = vmatpush.msra.mxu0 0.0
  %349 = vmatpush.msra.mxu0 0.0
  %350 = vmatpush.msra.mxu0 0.0
  %351 = vmatpush.msra.mxu0 0.0
  %352 = vmatpush.msra.mxu0 0.0
  %353 = vmatpush.msra.mxu0 0.0
  %354 = vmatpush.msra.mxu0 0.0
  %355 = vmatpush.msra.mxu0 0.0
  %356 = vmatpush.msra.mxu0 0.0
  %357 = vmatpush.msra.mxu0 %v53
  %358 = vmatpush.msra.mxu0 %v52
  %359 = vmatmul.f32.gmra.mxu0 %v248
  %v360 = vpop.f32.mrf.mxu0
  %v361 = vadd.f32 %v89, %v360
  %362 = vmatmul.f32.gmra.mxu0 %v251
  %v363 = vpop.f32.mrf.mxu0
  %v364 = vadd.f32 %v94, %v363
  %365 = vmatmul.f32.gmra.mxu0 %v254
  %v366 = vpop.f32.mrf.mxu0
  %v367 = vadd.f32 %v99, %v366
  %368 = vmatmul.f32.gmra.mxu0 %v257
  %v369 = vpop.f32.mrf.mxu0
  %v370 = vadd.f32 %v104, %v369
  %371 = vmatmul.f32.gmra.mxu0 %v260
  %v372 = vpop.f32.mrf.mxu0
  %v373 = vadd.f32 %v109, %v372
  %374 = vmatmul.f32.gmra.mxu0 %v263
  %v375 = vpop.f32.mrf.mxu0
  %v376 = vadd.f32 %v114, %v375
  %377 = vmatmul.f32.gmra.mxu0 %v266
  %v378 = vpop.f32.mrf.mxu0
  %v379 = vadd.f32 %v119, %v378
  %380 = vmatmul.f32.gmra.mxu0 %v269
  %v381 = vpop.f32.mrf.mxu0
  %v382 = vadd.f32 %v124, %v381
  %383 = vmatmul.f32.gmra.mxu0 %v272
  %v384 = vpop.f32.mrf.mxu0
  %v385 = vadd.f32 %v129, %v384
  %386 = vmatmul.f32.gmra.mxu0 %v275
  %v387 = vpop.f32.mrf.mxu0
  %v388 = vadd.f32 %v134, %v387
  %389 = vmatmul.f32.gmra.mxu0 %v278
  %v390 = vpop.f32.mrf.mxu0
  %v391 = vadd.f32 %v139, %v390
  %392 = vmatmul.f32.gmra.mxu0 %v281
  %v393 = vpop.f32.mrf.mxu0
  %v394 = vadd.f32 %v144, %v393
  %395 = vmatmul.f32.gmra.mxu0 %v284
  %v396 = vpop.f32.mrf.mxu0
  %v397 = vadd.f32 %v149, %v396
  %398 = vmatmul.f32.gmra.mxu0 %v287
  %v399 = vpop.f32.mrf.mxu0
  %v400 = vadd.f32 %v154, %v399
  %401 = vmatmul.f32.gmra.mxu0 %v290
  %v402 = vpop.f32.mrf.mxu0
  %v403 = vadd.f32 %v159, %v402
  %404 = vmatmul.f32.gmra.mxu0 %v293
  %v405 = vpop.f32.mrf.mxu0
  %v406 = vadd.f32 %v164, %v405
  %407 = vmatmul.f32.gmra.mxu0 %v296
  %v408 = vpop.f32.mrf.mxu0
  %v409 = vadd.f32 %v169, %v408
  %410 = vmatmul.f32.gmra.mxu0 %v299
  %v411 = vpop.f32.mrf.mxu0
  %v412 = vadd.f32 %v174, %v411
  %413 = vmatmul.f32.gmra.mxu0 %v302
  %v414 = vpop.f32.mrf.mxu0
  %v415 = vadd.f32 %v179, %v414
  %416 = vmatmul.f32.gmra.mxu0 %v305
  %v417 = vpop.f32.mrf.mxu0
  %v418 = vadd.f32 %v184, %v417
  %419 = vmatmul.f32.gmra.mxu0 %v308
  %v420 = vpop.f32.mrf.mxu0
  %v421 = vadd.f32 %v189, %v420
  %422 = vmatmul.f32.gmra.mxu0 %v311
  %v423 = vpop.f32.mrf.mxu0
  %v424 = vadd.f32 %v194, %v423
  %425 = vmatmul.f32.gmra.mxu0 %v314
  %v426 = vpop.f32.mrf.mxu0
  %v427 = vadd.f32 %v199, %v426
  %428 = vmatmul.f32.gmra.mxu0 %v317
  %v429 = vpop.f32.mrf.mxu0
  %v430 = vadd.f32 %v204, %v429
  %431 = vmatmul.f32.gmra.mxu0 %v320
  %v432 = vpop.f32.mrf.mxu0
  %v433 = vadd.f32 %v209, %v432
  %434 = vmatmul.f32.gmra.mxu0 %v323
  %v435 = vpop.f32.mrf.mxu0
  %v436 = vadd.f32 %v214, %v435
  %437 = vmatmul.f32.gmra.mxu0 %v326
  %v438 = vpop.f32.mrf.mxu0
  %v439 = vadd.f32 %v219, %v438
  %440 = vmatmul.f32.gmra.mxu0 %v329
  %v441 = vpop.f32.mrf.mxu0
  %v442 = vadd.f32 %v224, %v441
  %443 = vmatmul.f32.gmra.mxu0 %v332
  %v444 = vpop.f32.mrf.mxu0
  %v445 = vadd.f32 %v229, %v444
  %446 = vmatmul.f32.gmra.mxu0 %v335
  %v447 = vpop.f32.mrf.mxu0
  %v448 = vadd.f32 %v234, %v447
  %449 = vmatmul.f32.gmra.mxu0 %v338
  %v450 = vpop.f32.mrf.mxu0
  %v451 = vadd.f32 %v239, %v450
  %452 = vmatmul.f32.gmra.mxu0 %v341
  %v453 = vpop.f32.mrf.mxu0
  %v454 = vadd.f32 %v244, %v453
  %455 = vdwg.mxu0
  %456 = vadd.xlane.f32.xlu0 %v361
  %v457 = vpop.xlane.xlu0 %456
  %458 = vadd.xlane.f32.xlu0 %v364
  %v459 = vpop.xlane.xlu0 %458
  %460 = vadd.xlane.f32.xlu0 %v367
  %v461 = vpop.xlane.xlu0 %460
  %462 = vadd.xlane.f32.xlu0 %v370
  %v463 = vpop.xlane.xlu0 %462
  %464 = vadd.xlane.f32.xlu0 %v373
  %v465 = vpop.xlane.xlu0 %464
  %466 = vadd.xlane.f32.xlu0 %v376
  %v467 = vpop.xlane.xlu0 %466
  %468 = vadd.xlane.f32.xlu0 %v379
  %v469 = vpop.xlane.xlu0 %468
  %470 = vadd.xlane.f32.xlu0 %v382
  %v471 = vpop.xlane.xlu0 %470
  %472 = vadd.xlane.f32.xlu0 %v385
  %v473 = vpop.xlane.xlu0 %472
  %474 = vadd.xlane.f32.xlu0 %v388
  %v475 = vpop.xlane.xlu0 %474
  %476 = vadd.xlane.f32.xlu0 %v391
  %v477 = vpop.xlane.xlu0 %476
  %478 = vadd.xlane.f32.xlu0 %v394
  %v479 = vpop.xlane.xlu0 %478
  %480 = vadd.xlane.f32.xlu0 %v397
  %v481 = vpop.xlane.xlu0 %480
  %482 = vadd.xlane.f32.xlu0 %v400
  %v483 = vpop.xlane.xlu0 %482
  %484 = vadd.xlane.f32.xlu0 %v403
  %v485 = vpop.xlane.xlu0 %484
  %486 = vadd.xlane.f32.xlu0 %v406
  %v487 = vpop.xlane.xlu0 %486
  %488 = vadd.xlane.f32.xlu0 %v409
  %v489 = vpop.xlane.xlu0 %488
  %490 = vadd.xlane.f32.xlu0 %v412
  %v491 = vpop.xlane.xlu0 %490
  %492 = vadd.xlane.f32.xlu0 %v415
  %v493 = vpop.xlane.xlu0 %492
  %494 = vadd.xlane.f32.xlu0 %v418
  %v495 = vpop.xlane.xlu0 %494
  %496 = vadd.xlane.f32.xlu0 %v421
  %v497 = vpop.xlane.xlu0 %496
  %498 = vadd.xlane.f32.xlu0 %v424
  %v499 = vpop.xlane.xlu0 %498
  %500 = vadd.xlane.f32.xlu0 %v427
  %v501 = vpop.xlane.xlu0 %500
  %502 = vadd.xlane.f32.xlu0 %v430
  %v503 = vpop.xlane.xlu0 %502
  %504 = vadd.xlane.f32.xlu0 %v433
  %v505 = vpop.xlane.xlu0 %504
  %506 = vadd.xlane.f32.xlu0 %v436
  %v507 = vpop.xlane.xlu0 %506
  %508 = vadd.xlane.f32.xlu0 %v439
  %v509 = vpop.xlane.xlu0 %508
  %510 = vadd.xlane.f32.xlu0 %v442
  %v511 = vpop.xlane.xlu0 %510
  %512 = vadd.xlane.f32.xlu0 %v445
  %v513 = vpop.xlane.xlu0 %512
  %514 = vadd.xlane.f32.xlu0 %v448
  %v515 = vpop.xlane.xlu0 %514
  %516 = vadd.xlane.f32.xlu0 %v451
  %v517 = vpop.xlane.xlu0 %516
  %518 = vadd.xlane.f32.xlu0 %v454
  %v519 = vpop.xlane.xlu0 %518
  %v520 = vmul.f32 %v361, %v361
  %v521 = vmul.f32 %v364, %v364
  %v522 = vmul.f32 %v367, %v367
  %v523 = vmul.f32 %v370, %v370
  %v524 = vmul.f32 %v373, %v373
  %v525 = vmul.f32 %v376, %v376
  %v526 = vmul.f32 %v379, %v379
  %v527 = vmul.f32 %v382, %v382
  %v528 = vmul.f32 %v385, %v385
  %v529 = vmul.f32 %v388, %v388
  %v530 = vmul.f32 %v391, %v391
  %v531 = vmul.f32 %v394, %v394
  %v532 = vmul.f32 %v397, %v397
  %v533 = vmul.f32 %v400, %v400
  %v534 = vmul.f32 %v403, %v403
  %v535 = vmul.f32 %v406, %v406
  %v536 = vmul.f32 %v409, %v409
  %v537 = vmul.f32 %v412, %v412
  %v538 = vmul.f32 %v415, %v415
  %v539 = vmul.f32 %v418, %v418
  %v540 = vmul.f32 %v421, %v421
  %v541 = vmul.f32 %v424, %v424
  %v542 = vmul.f32 %v427, %v427
  %v543 = vmul.f32 %v430, %v430
  %v544 = vmul.f32 %v433, %v433
  %v545 = vmul.f32 %v436, %v436
  %v546 = vmul.f32 %v439, %v439
  %v547 = vmul.f32 %v442, %v442
  %v548 = vmul.f32 %v445, %v445
  %v549 = vmul.f32 %v448, %v448
  %v550 = vmul.f32 %v451, %v451
  %v551 = vmul.f32 %v454, %v454
  %552 = vadd.xlane.f32.xlu0 %v520
  %v553 = vpop.xlane.xlu0 %552
  %554 = vadd.xlane.f32.xlu0 %v521
  %v555 = vpop.xlane.xlu0 %554
  %556 = vadd.xlane.f32.xlu0 %v522
  %v557 = vpop.xlane.xlu0 %556
  %558 = vadd.xlane.f32.xlu0 %v523
  %v559 = vpop.xlane.xlu0 %558
  %560 = vadd.xlane.f32.xlu0 %v524
  %v561 = vpop.xlane.xlu0 %560
  %562 = vadd.xlane.f32.xlu0 %v525
  %v563 = vpop.xlane.xlu0 %562
  %564 = vadd.xlane.f32.xlu0 %v526
  %v565 = vpop.xlane.xlu0 %564
  %566 = vadd.xlane.f32.xlu0 %v527
  %v567 = vpop.xlane.xlu0 %566
  %568 = vadd.xlane.f32.xlu0 %v528
  %v569 = vpop.xlane.xlu0 %568
  %570 = vadd.xlane.f32.xlu0 %v529
  %v571 = vpop.xlane.xlu0 %570
  %572 = vadd.xlane.f32.xlu0 %v530
  %v573 = vpop.xlane.xlu0 %572
  %574 = vadd.xlane.f32.xlu0 %v531
  %v575 = vpop.xlane.xlu0 %574
  %576 = vadd.xlane.f32.xlu0 %v532
  %v577 = vpop.xlane.xlu0 %576
  %578 = vadd.xlane.f32.xlu0 %v533
  %v579 = vpop.xlane.xlu0 %578
  %580 = vadd.xlane.f32.xlu0 %v534
  %v581 = vpop.xlane.xlu0 %580
  %582 = vadd.xlane.f32.xlu0 %v535
  %v583 = vpop.xlane.xlu0 %582
  %584 = vadd.xlane.f32.xlu0 %v536
  %v585 = vpop.xlane.xlu0 %584
  %586 = vadd.xlane.f32.xlu0 %v537
  %v587 = vpop.xlane.xlu0 %586
  %588 = vadd.xlane.f32.xlu0 %v538
  %v589 = vpop.xlane.xlu0 %588
  %590 = vadd.xlane.f32.xlu0 %v539
  %v591 = vpop.xlane.xlu0 %590
  %592 = vadd.xlane.f32.xlu0 %v540
  %v593 = vpop.xlane.xlu0 %592
  %594 = vadd.xlane.f32.xlu0 %v541
  %v595 = vpop.xlane.xlu0 %594
  %596 = vadd.xlane.f32.xlu0 %v542
  %v597 = vpop.xlane.xlu0 %596
  %598 = vadd.xlane.f32.xlu0 %v543
  %v599 = vpop.xlane.xlu0 %598
  %600 = vadd.xlane.f32.xlu0 %v544
  %v601 = vpop.xlane.xlu0 %600
  %602 = vadd.xlane.f32.xlu0 %v545
  %v603 = vpop.xlane.xlu0 %602
  %604 = vadd.xlane.f32.xlu0 %v546
  %v605 = vpop.xlane.xlu0 %604
  %606 = vadd.xlane.f32.xlu0 %v547
  %v607 = vpop.xlane.xlu0 %606
  %608 = vadd.xlane.f32.xlu0 %v548
  %v609 = vpop.xlane.xlu0 %608
  %610 = vadd.xlane.f32.xlu0 %v549
  %v611 = vpop.xlane.xlu0 %610
  %612 = vadd.xlane.f32.xlu0 %v550
  %v613 = vpop.xlane.xlu0 %612
  %614 = vadd.xlane.f32.xlu0 %v551
  %v615 = vpop.xlane.xlu0 %614
  %v616 = vadd.f32 %v457, %v473
  %v617 = vadd.f32 %v459, %v475
  %v618 = vadd.f32 %v461, %v477
  %v619 = vadd.f32 %v463, %v479
  %v620 = vadd.f32 %v465, %v481
  %v621 = vadd.f32 %v467, %v483
  %v622 = vadd.f32 %v469, %v485
  %v623 = vadd.f32 %v471, %v487
  %v624 = vadd.f32 %v616, %v489
  %v625 = vadd.f32 %v617, %v491
  %v626 = vadd.f32 %v618, %v493
  %v627 = vadd.f32 %v619, %v495
  %v628 = vadd.f32 %v620, %v497
  %v629 = vadd.f32 %v621, %v499
  %v630 = vadd.f32 %v622, %v501
  %v631 = vadd.f32 %v623, %v503
  %v632 = vadd.f32 %v624, %v505
  %v633 = vadd.f32 %v625, %v507
  %v634 = vadd.f32 %v626, %v509
  %v635 = vadd.f32 %v627, %v511
  %v636 = vadd.f32 %v628, %v513
  %v637 = vadd.f32 %v629, %v515
  %v638 = vadd.f32 %v630, %v517
  %v639 = vadd.f32 %v631, %v519
  %v640 = vadd.f32 %v553, %v569
  %v641 = vadd.f32 %v555, %v571
  %v642 = vadd.f32 %v557, %v573
  %v643 = vadd.f32 %v559, %v575
  %v644 = vadd.f32 %v561, %v577
  %v645 = vadd.f32 %v563, %v579
  %v646 = vadd.f32 %v565, %v581
  %v647 = vadd.f32 %v567, %v583
  %v648 = vadd.f32 %v640, %v585
  %v649 = vadd.f32 %v641, %v587
  %v650 = vadd.f32 %v642, %v589
  %v651 = vadd.f32 %v643, %v591
  %v652 = vadd.f32 %v644, %v593
  %v653 = vadd.f32 %v645, %v595
  %v654 = vadd.f32 %v646, %v597
  %v655 = vadd.f32 %v647, %v599
  %v656 = vadd.f32 %v648, %v601
  %v657 = vadd.f32 %v649, %v603
  %v658 = vadd.f32 %v650, %v605
  %v659 = vadd.f32 %v651, %v607
  %v660 = vadd.f32 %v652, %v609
  %v661 = vadd.f32 %v653, %v611
  %v662 = vadd.f32 %v654, %v613
  %v663 = vadd.f32 %v655, %v615
  %v664 = vmul.f32 %v632, 0.001953125
  %v665 = vmul.f32 %v633, 0.001953125
  %v666 = vmul.f32 %v634, 0.001953125
  %v667 = vmul.f32 %v635, 0.001953125
  %v668 = vmul.f32 %v636, 0.001953125
  %v669 = vmul.f32 %v637, 0.001953125
  %v670 = vmul.f32 %v638, 0.001953125
  %v671 = vmul.f32 %v639, 0.001953125
  %v672 = vmul.f32 %v656, 0.001953125
  %v673 = vmul.f32 %v657, 0.001953125
  %v674 = vmul.f32 %v658, 0.001953125
  %v675 = vmul.f32 %v659, 0.001953125
  %v676 = vmul.f32 %v660, 0.001953125
  %v677 = vmul.f32 %v661, 0.001953125
  %v678 = vmul.f32 %v662, 0.001953125
  %v679 = vmul.f32 %v663, 0.001953125
  %v680 = vmul.f32 %v664, %v664
  %v681 = vmul.f32 %v665, %v665
  %v682 = vmul.f32 %v666, %v666
  %v683 = vmul.f32 %v667, %v667
  %v684 = vmul.f32 %v668, %v668
  %v685 = vmul.f32 %v669, %v669
  %v686 = vmul.f32 %v670, %v670
  %v687 = vmul.f32 %v671, %v671
  %v688 = vsub.f32 %v672, %v680
  %v689 = vsub.f32 %v673, %v681
  %v690 = vsub.f32 %v674, %v682
  %v691 = vsub.f32 %v675, %v683
  %v692 = vsub.f32 %v676, %v684
  %v693 = vsub.f32 %v677, %v685
  %v694 = vsub.f32 %v678, %v686
  %v695 = vsub.f32 %v679, %v687
  %v696 = vld [vmem:[%s3] sm:$0xff]
  %v697 = vld [vmem:[%s3 + $0x8] sm:$0xff]
  %v698 = vld [vmem:[%s3 + $0x10] sm:$0xff]
  %v699 = vld [vmem:[%s3 + $0x18] sm:$0xff]
  %v700 = vld [vmem:[%s3 + $0x20] sm:$0xff]
  %v701 = vld [vmem:[%s3 + $0x28] sm:$0xff]
  %v702 = vld [vmem:[%s3 + $0x30] sm:$0xff]
  %v703 = vld [vmem:[%s3 + $0x38] sm:$0xff]
  %v704 = vadd.f32 %v688, 1e-05
  %v705 = vadd.f32 %v689, 1e-05
  %v706 = vadd.f32 %v690, 1e-05
  %v707 = vadd.f32 %v691, 1e-05
  %v708 = vadd.f32 %v692, 1e-05
  %v709 = vadd.f32 %v693, 1e-05
  %v710 = vadd.f32 %v694, 1e-05
  %v711 = vadd.f32 %v695, 1e-05
  %v712 = vrsqrt.pop %v704
  %v713 = vmul.f32 %v712, %v704
  %v714 = vmul.f32 %v713, %v712
  %v715 = vmul.f32 0.5, %v714
  %v716 = vsub.f32 1.5, %v715
  %v717 = vmul.f32 %v712, %v716
  %vm718 = vweird.f32 %v704
  %vm719 = vweird.f32 %v712
  %vm720 = vmor %vm718, %vm719
  %v721 = vsel %vm720, %v712, %v717
  %v722 = vrsqrt.pop %v705
  %v723 = vmul.f32 %v722, %v705
  %v724 = vmul.f32 %v723, %v722
  %v725 = vmul.f32 0.5, %v724
  %v726 = vsub.f32 1.5, %v725
  %v727 = vmul.f32 %v722, %v726
  %vm728 = vweird.f32 %v705
  %vm729 = vweird.f32 %v722
  %vm730 = vmor %vm728, %vm729
  %v731 = vsel %vm730, %v722, %v727
  %v732 = vrsqrt.pop %v706
  %v733 = vmul.f32 %v732, %v706
  %v734 = vmul.f32 %v733, %v732
  %v735 = vmul.f32 0.5, %v734
  %v736 = vsub.f32 1.5, %v735
  %v737 = vmul.f32 %v732, %v736
  %vm738 = vweird.f32 %v706
  %vm739 = vweird.f32 %v732
  %vm740 = vmor %vm738, %vm739
  %v741 = vsel %vm740, %v732, %v737
  %v742 = vrsqrt.pop %v707
  %v743 = vmul.f32 %v742, %v707
  %v744 = vmul.f32 %v743, %v742
  %v745 = vmul.f32 0.5, %v744
  %v746 = vsub.f32 1.5, %v745
  %v747 = vmul.f32 %v742, %v746
  %vm748 = vweird.f32 %v707
  %vm749 = vweird.f32 %v742
  %vm750 = vmor %vm748, %vm749
  %v751 = vsel %vm750, %v742, %v747
  %v752 = vrsqrt.pop %v708
  %v753 = vmul.f32 %v752, %v708
  %v754 = vmul.f32 %v753, %v752
  %v755 = vmul.f32 0.5, %v754
  %v756 = vsub.f32 1.5, %v755
  %v757 = vmul.f32 %v752, %v756
  %vm758 = vweird.f32 %v708
  %vm759 = vweird.f32 %v752
  %vm760 = vmor %vm758, %vm759
  %v761 = vsel %vm760, %v752, %v757
  %v762 = vrsqrt.pop %v709
  %v763 = vmul.f32 %v762, %v709
  %v764 = vmul.f32 %v763, %v762
  %v765 = vmul.f32 0.5, %v764
  %v766 = vsub.f32 1.5, %v765
  %v767 = vmul.f32 %v762, %v766
  %vm768 = vweird.f32 %v709
  %vm769 = vweird.f32 %v762
  %vm770 = vmor %vm768, %vm769
  %v771 = vsel %vm770, %v762, %v767
  %v772 = vrsqrt.pop %v710
  %v773 = vmul.f32 %v772, %v710
  %v774 = vmul.f32 %v773, %v772
  %v775 = vmul.f32 0.5, %v774
  %v776 = vsub.f32 1.5, %v775
  %v777 = vmul.f32 %v772, %v776
  %vm778 = vweird.f32 %v710
  %vm779 = vweird.f32 %v772
  %vm780 = vmor %vm778, %vm779
  %v781 = vsel %vm780, %v772, %v777
  %v782 = vrsqrt.pop %v711
  %v783 = vmul.f32 %v782, %v711
  %v784 = vmul.f32 %v783, %v782
  %v785 = vmul.f32 0.5, %v784
  %v786 = vsub.f32 1.5, %v785
  %v787 = vmul.f32 %v782, %v786
  %vm788 = vweird.f32 %v711
  %vm789 = vweird.f32 %v782
  %vm790 = vmor %vm788, %vm789
  %v791 = vsel %vm790, %v782, %v787
  %v792 = vmul.f32 %v696, %v721
  %v793 = vmul.f32 %v697, %v731
  %v794 = vmul.f32 %v698, %v741
  %v795 = vmul.f32 %v699, %v751
  %v796 = vmul.f32 %v700, %v761
  %v797 = vmul.f32 %v701, %v771
  %v798 = vmul.f32 %v702, %v781
  %v799 = vmul.f32 %v703, %v791
  %v800 = vld [vmem:[%s4] sm:$0xff]
  %v801 = vld [vmem:[%s4 + $0x8] sm:$0xff]
  %v802 = vld [vmem:[%s4 + $0x10] sm:$0xff]
  %v803 = vld [vmem:[%s4 + $0x18] sm:$0xff]
  %v804 = vld [vmem:[%s4 + $0x20] sm:$0xff]
  %v805 = vld [vmem:[%s4 + $0x28] sm:$0xff]
  %v806 = vld [vmem:[%s4 + $0x30] sm:$0xff]
  %v807 = vld [vmem:[%s4 + $0x38] sm:$0xff]
  %v808 = vmul.f32 %v664, %v792
  %v809 = vmul.f32 %v665, %v793
  %v810 = vmul.f32 %v666, %v794
  %v811 = vmul.f32 %v667, %v795
  %v812 = vmul.f32 %v668, %v796
  %v813 = vmul.f32 %v669, %v797
  %v814 = vmul.f32 %v670, %v798
  %v815 = vmul.f32 %v671, %v799
  %v816 = vsub.f32 %v800, %v808
  %v817 = vsub.f32 %v801, %v809
  %v818 = vsub.f32 %v802, %v810
  %v819 = vsub.f32 %v803, %v811
  %v820 = vsub.f32 %v804, %v812
  %v821 = vsub.f32 %v805, %v813
  %v822 = vsub.f32 %v806, %v814
  %v823 = vsub.f32 %v807, %v815
  %825 = vset.pattern.permute.xlu0 0
  %826 = vperm.xlu0 %825, %v792
  %v827 = vpop.permute.xlu0 %826
  %830 = vset.pattern.permute.xlu0 0
  %831 = vperm.xlu0 %830, %v793
  %v832 = vpop.permute.xlu0 %831
  %835 = vset.pattern.permute.xlu0 0
  %836 = vperm.xlu0 %835, %v794
  %v837 = vpop.permute.xlu0 %836
  %840 = vset.pattern.permute.xlu0 0
  %841 = vperm.xlu0 %840, %v795
  %v842 = vpop.permute.xlu0 %841
  %845 = vset.pattern.permute.xlu0 0
  %846 = vperm.xlu0 %845, %v796
  %v847 = vpop.permute.xlu0 %846
  %850 = vset.pattern.permute.xlu0 0
  %851 = vperm.xlu0 %850, %v797
  %v852 = vpop.permute.xlu0 %851
  %855 = vset.pattern.permute.xlu0 0
  %856 = vperm.xlu0 %855, %v798
  %v857 = vpop.permute.xlu0 %856
  %860 = vset.pattern.permute.xlu0 0
  %861 = vperm.xlu0 %860, %v799
  %v862 = vpop.permute.xlu0 %861
  %v864 = vmul.f32 %v361, %v827
  %v865 = vmul.f32 %v364, %v832
  %v866 = vmul.f32 %v367, %v837
  %v867 = vmul.f32 %v370, %v842
  %v868 = vmul.f32 %v373, %v847
  %v869 = vmul.f32 %v376, %v852
  %v870 = vmul.f32 %v379, %v857
  %v871 = vmul.f32 %v382, %v862
  %873 = vset.pattern.permute.xlu0 0
  %874 = vperm.xlu0 %873, %v816
  %v875 = vpop.permute.xlu0 %874
  %878 = vset.pattern.permute.xlu0 0
  %879 = vperm.xlu0 %878, %v817
  %v880 = vpop.permute.xlu0 %879
  %883 = vset.pattern.permute.xlu0 0
  %884 = vperm.xlu0 %883, %v818
  %v885 = vpop.permute.xlu0 %884
  %888 = vset.pattern.permute.xlu0 0
  %889 = vperm.xlu0 %888, %v819
  %v890 = vpop.permute.xlu0 %889
  %893 = vset.pattern.permute.xlu0 0
  %894 = vperm.xlu0 %893, %v820
  %v895 = vpop.permute.xlu0 %894
  %898 = vset.pattern.permute.xlu0 0
  %899 = vperm.xlu0 %898, %v821
  %v900 = vpop.permute.xlu0 %899
  %903 = vset.pattern.permute.xlu0 0
  %904 = vperm.xlu0 %903, %v822
  %v905 = vpop.permute.xlu0 %904
  %908 = vset.pattern.permute.xlu0 0
  %909 = vperm.xlu0 %908, %v823
  %v910 = vpop.permute.xlu0 %909
  %v912 = vadd.f32 %v864, %v875
  %v913 = vadd.f32 %v865, %v880
  %v914 = vadd.f32 %v866, %v885
  %v915 = vadd.f32 %v867, %v890
  %v916 = vadd.f32 %v868, %v895
  %v917 = vadd.f32 %v869, %v900
  %v918 = vadd.f32 %v870, %v905
  %v919 = vadd.f32 %v871, %v910
  %v920 = vmax.f32 %v912, 0.0
  %v921 = vmax.f32 %v913, 0.0
  %v922 = vmax.f32 %v914, 0.0
  %v923 = vmax.f32 %v915, 0.0
  %v924 = vmax.f32 %v916, 0.0
  %v925 = vmax.f32 %v917, 0.0
  %v926 = vmax.f32 %v918, 0.0
  %v927 = vmax.f32 %v919, 0.0
  %v928 = vmul.f32 %v385, %v827
  %v929 = vmul.f32 %v388, %v832
  %v930 = vmul.f32 %v391, %v837
  %v931 = vmul.f32 %v394, %v842
  %v932 = vmul.f32 %v397, %v847
  %v933 = vmul.f32 %v400, %v852
  %v934 = vmul.f32 %v403, %v857
  %v935 = vmul.f32 %v406, %v862
  %v936 = vadd.f32 %v928, %v875
  %v937 = vadd.f32 %v929, %v880
  %v938 = vadd.f32 %v930, %v885
  %v939 = vadd.f32 %v931, %v890
  %v940 = vadd.f32 %v932, %v895
  %v941 = vadd.f32 %v933, %v900
  %v942 = vadd.f32 %v934, %v905
  %v943 = vadd.f32 %v935, %v910
  %v944 = vmax.f32 %v936, 0.0
  %v945 = vmax.f32 %v937, 0.0
  %v946 = vmax.f32 %v938, 0.0
  %v947 = vmax.f32 %v939, 0.0
  %v948 = vmax.f32 %v940, 0.0
  %v949 = vmax.f32 %v941, 0.0
  %v950 = vmax.f32 %v942, 0.0
  %v951 = vmax.f32 %v943, 0.0
  %v952 = vadd.f32 %v920, %v944
  %v953 = vadd.f32 %v921, %v945
  %v954 = vadd.f32 %v922, %v946
  %v955 = vadd.f32 %v923, %v947
  %v956 = vadd.f32 %v924, %v948
  %v957 = vadd.f32 %v925, %v949
  %v958 = vadd.f32 %v926, %v950
  %v959 = vadd.f32 %v927, %v951
  %v960 = vmul.f32 %v409, %v827
  %v961 = vmul.f32 %v412, %v832
  %v962 = vmul.f32 %v415, %v837
  %v963 = vmul.f32 %v418, %v842
  %v964 = vmul.f32 %v421, %v847
  %v965 = vmul.f32 %v424, %v852
  %v966 = vmul.f32 %v427, %v857
  %v967 = vmul.f32 %v430, %v862
  %v968 = vadd.f32 %v960, %v875
  %v969 = vadd.f32 %v961, %v880
  %v970 = vadd.f32 %v962, %v885
  %v971 = vadd.f32 %v963, %v890
  %v972 = vadd.f32 %v964, %v895
  %v973 = vadd.f32 %v965, %v900
  %v974 = vadd.f32 %v966, %v905
  %v975 = vadd.f32 %v967, %v910
  %v976 = vmax.f32 %v968, 0.0
  %v977 = vmax.f32 %v969, 0.0
  %v978 = vmax.f32 %v970, 0.0
  %v979 = vmax.f32 %v971, 0.0
  %v980 = vmax.f32 %v972, 0.0
  %v981 = vmax.f32 %v973, 0.0
  %v982 = vmax.f32 %v974, 0.0
  %v983 = vmax.f32 %v975, 0.0
  %v984 = vadd.f32 %v952, %v976
  %v985 = vadd.f32 %v953, %v977
  %v986 = vadd.f32 %v954, %v978
  %v987 = vadd.f32 %v955, %v979
  %v988 = vadd.f32 %v956, %v980
  %v989 = vadd.f32 %v957, %v981
  %v990 = vadd.f32 %v958, %v982
  %v991 = vadd.f32 %v959, %v983
  %v992 = vmul.f32 %v433, %v827
  %v993 = vmul.f32 %v436, %v832
  %v994 = vmul.f32 %v439, %v837
  %v995 = vmul.f32 %v442, %v842
  %v996 = vmul.f32 %v445, %v847
  %v997 = vmul.f32 %v448, %v852
  %v998 = vmul.f32 %v451, %v857
  %v999 = vmul.f32 %v454, %v862
  %v1000 = vadd.f32 %v992, %v875
  %v1001 = vadd.f32 %v993, %v880
  %v1002 = vadd.f32 %v994, %v885
  %v1003 = vadd.f32 %v995, %v890
  %v1004 = vadd.f32 %v996, %v895
  %v1005 = vadd.f32 %v997, %v900
  %v1006 = vadd.f32 %v998, %v905
  %v1007 = vadd.f32 %v999, %v910
  %v1008 = vmax.f32 %v1000, 0.0
  %v1009 = vmax.f32 %v1001, 0.0
  %v1010 = vmax.f32 %v1002, 0.0
  %v1011 = vmax.f32 %v1003, 0.0
  %v1012 = vmax.f32 %v1004, 0.0
  %v1013 = vmax.f32 %v1005, 0.0
  %v1014 = vmax.f32 %v1006, 0.0
  %v1015 = vmax.f32 %v1007, 0.0
  %v1016 = vadd.f32 %v984, %v1008
  %v1017 = vadd.f32 %v985, %v1009
  %v1018 = vadd.f32 %v986, %v1010
  %v1019 = vadd.f32 %v987, %v1011
  %v1020 = vadd.f32 %v988, %v1012
  %v1021 = vadd.f32 %v989, %v1013
  %v1022 = vadd.f32 %v990, %v1014
  %v1023 = vadd.f32 %v991, %v1015
  %v1024 = vmul.f32 %v1016, 0.25
  %v1025 = vmul.f32 %v1017, 0.25
  %v1026 = vmul.f32 %v1018, 0.25
  %v1027 = vmul.f32 %v1019, 0.25
  %v1028 = vmul.f32 %v1020, 0.25
  %v1029 = vmul.f32 %v1021, 0.25
  %v1030 = vmul.f32 %v1022, 0.25
  %v1031 = vmul.f32 %v1023, 0.25
  %1032 = vst [vmem:[%s5] sm:$0xff] %v1024
  %1033 = vst [vmem:[%s5 + $0x8] sm:$0xff] %v1025
  %1034 = vst [vmem:[%s5 + $0x10] sm:$0xff] %v1026
  %1035 = vst [vmem:[%s5 + $0x18] sm:$0xff] %v1027
  %1036 = vst [vmem:[%s5 + $0x20] sm:$0xff] %v1028
  %1037 = vst [vmem:[%s5 + $0x28] sm:$0xff] %v1029
  %1038 = vst [vmem:[%s5 + $0x30] sm:$0xff] %v1030
  %1039 = vst [vmem:[%s5 + $0x38] sm:$0xff] %v1031
  // Predicated region
  $region22: #{avgpool_conv2d_bn_relu.1} parent=0 // pred_check
    _
  $region23: #{avgpool_conv2d_bn_relu.1} parent=0 // pred_check_branch
    %1041 = sbr.rel (0) target = $region25
  $region24: #{avgpool_conv2d_bn_relu.1} parent=0 // pred_region
    _
  $region25: #{avgpool_conv2d_bn_relu.1} parent=0 // pred_fallthru
    _
  // Predicated region
  $region26: #{avgpool_conv2d_bn_relu.1} parent=0 // pred_check
    _
  $region27: #{avgpool_conv2d_bn_relu.1} parent=0 // pred_check_branch
    %1043 = sbr.rel (0) target = $region29
  $region28: #{avgpool_conv2d_bn_relu.1} parent=0 // pred_region
    _
  $region29: #{avgpool_conv2d_bn_relu.1} parent=0 // pred_fallthru
    _

</llo_original>
